<compile_context>
chip_gen: v5e
topology: v5e:2x2
jax: 0.10.0
libtpu: 0.0.40
codegen_flags: <defaults>
</compile_context>

<pallas_src>
import functools

import jax
import jax.numpy as jnp
from jax.experimental import pallas as pl
from jax.experimental.pallas import tpu as pltpu


# ----------------------------------------------------------------------------
# Pallas kernel: fused (block-diagonal) SubNets + low-rank fusion head
# ----------------------------------------------------------------------------
def lmf_kernel(x_ref, w1_ref, b1_ref, w2_ref, b2_ref, w3_ref, b3_ref,
               frest_ref, fones_ref, fbias_ref,
               out_ref, *, rank, o_pad, out_dim):
    f32 = jnp.float32
    bf16 = jnp.bfloat16

    # Layer 1: BN(eval) + Dropout(eval) are folded into w1/b1 at pack time,
    # so the bf16 input tile feeds the MXU directly.
    y1 = jnp.maximum(jnp.dot(x_ref[...], w1_ref[...],
                             preferred_element_type=f32) + b1_ref[...], 0.0)
    y2 = jnp.maximum(jnp.dot(y1.astype(bf16), w2_ref[...],
                             preferred_element_type=f32) + b2_ref[...], 0.0)
    y3 = jnp.maximum(jnp.dot(y2.astype(bf16), w3_ref[...],
                             preferred_element_type=f32) + b3_ref[...], 0.0)
    # y3 == [audio_h | video_h]

    # Single fusion matmul against blockdiag(audio_rest, video_rest); the
    # factors' "ones" rows are a broadcast bias (fusion_weights already folded
    # into the audio-side factors).
    fused = jnp.dot(y3.astype(bf16), frest_ref[...],
                    preferred_element_type=f32) + fones_ref[...]

    ro = rank * o_pad
    # zy product fused into the rank reduction: no (TB, rank*o_pad) temporary,
    # all slice boundaries are 128-lane aligned.
    acc = fused[:, 0:o_pad] * fused[:, ro:ro + o_pad]
    for r in range(1, rank):
        acc = acc + (fused[:, r * o_pad:(r + 1) * o_pad] *
                     fused[:, ro + r * o_pad:ro + (r + 1) * o_pad])

    # Unpadded store: (TB, out_dim) block (last dim == full array dim).
    out_ref[...] = acc[:, :out_dim] + fbias_ref[...]
    # TODO(synk): use_softmax=True branch (F.softmax) not implemented; module default is False.


# ----------------------------------------------------------------------------
# Wrapper
# ----------------------------------------------------------------------------
def lmf_forward(audio_x, video_x, params):
    B = audio_x.shape[0]
    out_dim = params["out_dim"]
    o_pad = params["o_pad"]
    rank = params["rank"]

    # Layout plumbing only: one concat so layer 1 is a single block-diagonal
    # matmul.  Shipped as bf16 (BN already folded into W1/b1).
    x_cat = jnp.concatenate([audio_x, video_x], axis=1).astype(jnp.bfloat16)
    cat_in = x_cat.shape[1]
    cat_hid = params["w1f_cat"].shape[1]
    ro2 = params["frest_cat"].shape[1]      # 2 * rank * o_pad

    # Batch tile: aim for >=2 grid steps when B allows it (v7x megacore can
    # shard the "parallel" axis), cap at 1024 rows/step for large B (v6e).
    if B <= 16:
        tb = B
    else:
        tb = min(1024, ((pl.cdiv(B, 2) + 15) // 16) * 16)
    grid = (pl.cdiv(B, tb),)

    # Explicit scoped-VMEM budget (v5e default is only 16 MiB): resident
    # weights + double-buffered x/out tiles + f32 temporaries, with margin.
    w_bytes = 2 * (cat_in * cat_hid + 2 * cat_hid * cat_hid + cat_hid * ro2)
    b_bytes = 4 * (3 * cat_hid + ro2 + out_dim)
    io_bytes = 2 * tb * cat_in * 2 + 2 * tb * out_dim * 4
    tmp_bytes = tb * (2 * ro2 + 3 * cat_hid + o_pad + out_dim) * 4
    vmem_limit = int(2 * (2 * (w_bytes + b_bytes) + io_bytes + tmp_bytes))
    vmem_limit = min(max(vmem_limit, 32 << 20), 48 << 20)

    def build_specs(buffered_consts):
        if buffered_consts:
            # Constant block index -> single-buffered (no DMA to hide).
            def const(shape):
                return pl.BlockSpec(shape, lambda i: (0, 0),
                                    pipeline_mode=pl.Buffered(1))
        else:
            def const(shape):
                return pl.BlockSpec(shape, lambda i: (0, 0))
        in_specs = [
            pl.BlockSpec((tb, cat_in), lambda i: (i, 0)),      # x tile (bf16)
            const((cat_in, cat_hid)), const((1, cat_hid)),     # w1' / b1' (BN folded)
            const((cat_hid, cat_hid)), const((1, cat_hid)),    # w2 / b2
            const((cat_hid, cat_hid)), const((1, cat_hid)),    # w3 / b3
            const((cat_hid, ro2)), const((1, ro2)),            # factor rest / ones
            const((1, out_dim)),                               # fusion bias (unpadded)
        ]
        out_spec = pl.BlockSpec((tb, out_dim), lambda i: (i, 0))
        return in_specs, out_spec

    def run(buffered_consts):
        in_specs, out_spec = build_specs(buffered_consts)
        out = pl.pallas_call(
            functools.partial(lmf_kernel, rank=rank, o_pad=o_pad,
                              out_dim=out_dim),
            out_shape=jax.ShapeDtypeStruct((B, out_dim), jnp.float32),
            grid_spec=pltpu.PrefetchScalarGridSpec(
                num_scalar_prefetch=0,
                grid=grid,
                in_specs=in_specs,
                out_specs=out_spec),
            compiler_params=pltpu.CompilerParams(
                dimension_semantics=("parallel",),
                vmem_limit_bytes=vmem_limit),
        )(x_cat,
          params["w1f_cat"], params["b1f_cat"],
          params["w2_cat"], params["b2_cat"],
          params["w3_cat"], params["b3_cat"],
          params["frest_cat"], params["fones_cat"],
          params["fusion_bias"])
        return jax.block_until_ready(out)

    try:
        return run(buffered_consts=True)
    except Exception:
        # pipeline_mode=pl.Buffered(1) not supported by this jax build:
        # fall back to default (double-buffered) constant specs.
        return run(buffered_consts=False)


# ----------------------------------------------------------------------------
# Deterministic parameter construction (mirrors LMF.__init__ shapes) + packing
# ----------------------------------------------------------------------------
def _block_diag(a, b):
    m1, n1 = a.shape
    m2, n2 = b.shape
    out = jnp.zeros((m1 + m2, n1 + n2), a.dtype)
    out = out.at[:m1, :n1].set(a)
    out = out.at[m1:, n1:].set(b)
    return out


def make_params(key, a_in, v_in, a_hid, v_hid, rank, out_dim):
    ks = jax.random.split(key, 16)
    k = iter(ks)

    def normal(key, shape, scale=0.1):
        return scale * jax.random.normal(key, shape, dtype=jnp.float32)

    def make_subnet(k1, k2, k3, k4, in_size, hid):
        # BatchNorm1d: gamma, beta, running stats -> folded scale/shift (eval)
        gamma = 1.0 + normal(k1, (1, in_size), 0.05)
        beta = normal(k2, (1, in_size), 0.05)
        rmean = jnp.zeros((1, in_size), jnp.float32)
        rvar = jnp.ones((1, in_size), jnp.float32)
        eps = 1e-5
        scale = gamma / jnp.sqrt(rvar + eps)
        shift = beta - rmean * scale
        kk = jax.random.split(k3, 3)
        kb = jax.random.split(k4, 3)
        w1 = normal(kk[0], (in_size, hid))
        w2 = normal(kk[1], (hid, hid))
        w3 = normal(kk[2], (hid, hid))
        b1 = normal(kb[0], (1, hid))
        b2 = normal(kb[1], (1, hid))
        b3 = normal(kb[2], (1, hid))
        return scale, shift, w1, b1, w2, b2, w3, b3

    a_sub = make_subnet(next(k), next(k), next(k), next(k), a_in, a_hid)
    v_sub = make_subnet(next(k), next(k), next(k), next(k), v_in, v_hid)

    # xavier_normal_-style factors
    def xavier(key, shape):
        fan_in = shape[1] * shape[2]
        fan_out = shape[0] * shape[2]
        std = (2.0 / (fan_in + fan_out)) ** 0.5
        return std * jax.random.normal(key, shape, dtype=jnp.float32)

    audio_factor = xavier(next(k), (rank, a_hid + 1, out_dim))
    video_factor = xavier(next(k), (rank, v_hid + 1, out_dim))
    fusion_weights = (2.0 / (1 + rank)) ** 0.5 * jax.random.normal(
        next(k), (1, rank), dtype=jnp.float32)
    fusion_bias = jnp.zeros((1, out_dim), jnp.float32)

    (a_scale, a_shift, a_w1, a_b1, a_w2, a_b2, a_w3, a_b3) = a_sub
    (v_scale, v_shift, v_w1, v_b1, v_w2, v_b2, v_w3, v_b3) = v_sub

    # ---- kernel-packed parameters -----------------------------------------
    o_pad = ((out_dim + 127) // 128) * 128      # lane-aligned internal width

    scale_cat = jnp.concatenate([a_scale, v_scale], axis=1)
    shift_cat = jnp.concatenate([a_shift, v_shift], axis=1)
    w1_cat_f32 = _block_diag(a_w1, v_w1)                    # f32
    b1_cat = jnp.concatenate([a_b1, v_b1], axis=1)

    # Fold BN (eval) into layer 1 IN F32, before the bf16 cast.
    w1f_cat = (scale_cat.reshape(-1, 1) * w1_cat_f32).astype(jnp.bfloat16)
    b1f_cat = shift_cat @ w1_cat_f32 + b1_cat               # stays f32

    w2_cat = _block_diag(a_w2, v_w2).astype(jnp.bfloat16)
    w3_cat = _block_diag(a_w3, v_w3).astype(jnp.bfloat16)
    b2_cat = jnp.concatenate([a_b2, v_b2], axis=1)
    b3_cat = jnp.concatenate([a_b3, v_b3], axis=1)

    def split_factor(factor, fold_weights):
        # factor: (R, H+1, O) -> ones (1, R*o_pad), rest (H, R*o_pad)
        ones = factor[:, 0, :]                                # (R, O)
        rest = jnp.transpose(factor[:, 1:, :], (1, 0, 2))     # (H, R, O)
        if fold_weights:
            w = fusion_weights.reshape(rank, 1)
            ones = ones * w
            rest = rest * w[None, :, :]
        pad = o_pad - out_dim
        ones = jnp.pad(ones, ((0, 0), (0, pad)))
        rest = jnp.pad(rest, ((0, 0), (0, 0), (0, pad)))
        return ones.reshape(1, rank * o_pad), rest.reshape(-1, rank * o_pad)

    # fusion_weights folded into the audio-side factors only (applied once).
    a_fones, a_frest = split_factor(audio_factor, fold_weights=True)
    v_fones, v_frest = split_factor(video_factor, fold_weights=False)
    frest_cat = _block_diag(a_frest, v_frest).astype(jnp.bfloat16)
    fones_cat = jnp.concatenate([a_fones, v_fones], axis=1)

    params = dict(
        # packed (kernel) parameters
        w1f_cat=w1f_cat, b1f_cat=b1f_cat,
        w2_cat=w2_cat, b2_cat=b2_cat,
        w3_cat=w3_cat, b3_cat=b3_cat,
        frest_cat=frest_cat, fones_cat=fones_cat,
        fusion_bias=fusion_bias,
        rank=rank, out_dim=out_dim, o_pad=o_pad,
        # original parameters (for the pure-JAX reference)
        a_scale=a_scale, a_shift=a_shift, a_w1=a_w1, a_b1=a_b1,
        a_w2=a_w2, a_b2=a_b2, a_w3=a_w3, a_b3=a_b3,
        v_scale=v_scale, v_shift=v_shift, v_w1=v_w1, v_b1=v_b1,
        v_w2=v_w2, v_b2=v_b2, v_w3=v_w3, v_b3=v_b3,
        audio_factor=audio_factor, video_factor=video_factor,
        fusion_weights=fusion_weights,
    )
    return params


# ----------------------------------------------------------------------------
# Pure-JAX reference mirroring the PyTorch forward (full f32, unfused)
# ----------------------------------------------------------------------------
def lmf_reference(audio_x, video_x, p):
    def subnet(x, scale, shift, w1, b1, w2, b2, w3, b3):
        n = x * scale + shift
        y1 = jax.nn.relu(n @ w1 + b1)
        y2 = jax.nn.relu(y1 @ w2 + b2)
        y3 = jax.nn.relu(y2 @ w3 + b3)
        return y3

    audio_h = subnet(audio_x, p["a_scale"], p["a_shift"], p["a_w1"], p["a_b1"],
                     p["a_w2"], p["a_b2"], p["a_w3"], p["a_b3"])
    video_h = subnet(video_x, p["v_scale"], p["v_shift"], p["v_w1"], p["v_b1"],
                     p["v_w2"], p["v_b2"], p["v_w3"], p["v_b3"])
    B = audio_h.shape[0]
    _a = jnp.concatenate([jnp.ones((B, 1), jnp.float32), audio_h], axis=1)
    _v = jnp.concatenate([jnp.ones((B, 1), jnp.float32), video_h], axis=1)
    fusion_audio = jnp.einsum("bj,rjo->rbo", _a, p["audio_factor"])
    fusion_video = jnp.einsum("bj,rjo->rbo", _v, p["video_factor"])
    zy = fusion_audio * fusion_video
    out = jnp.einsum("r,rbo->bo", p["fusion_weights"][0], zy) + p["fusion_bias"]
    return out


if __name__ == "__main__":
    # Small shapes consistent with LMF(audio_x:(B,A_IN), video_x:(B,V_IN))
    B, A_IN, V_IN = 8, 16, 32
    A_HID, V_HID = 32, 32
    RANK, OUT_DIM = 4, 8

    key = jax.random.PRNGKey(0)
    k_params, k_a, k_v = jax.random.split(key, 3)
    params = make_params(k_params, A_IN, V_IN, A_HID, V_HID, RANK, OUT_DIM)

    audio_x = jax.random.normal(k_a, (B, A_IN), dtype=jnp.float32)
    video_x = jax.random.normal(k_v, (B, V_IN), dtype=jnp.float32)

    out = lmf_forward(audio_x, video_x, params)
    out = jax.block_until_ready(out)

    ref = lmf_reference(audio_x, video_x, params)
    assert out.shape == (B, OUT_DIM)
    # bf16 inputs + bf16 MXU operands with f32 accumulation -> loosened tol.
    assert jnp.allclose(out, ref, atol=3e-2, rtol=3e-2), (
        f"mismatch: max abs err {jnp.max(jnp.abs(out - ref))}")

    print("KERNEL_OK")
</pallas_src>

<mosaic_0001>
module attributes {stable_mosaic.version = 11 : i64} {
  func.func @lmf_kernel(%arg0: i32, %arg1: memref<8x48xbf16, #tpu.memory_space<vmem>>, %arg2: memref<48x64xbf16, #tpu.memory_space<vmem>>, %arg3: memref<1x64xf32, #tpu.memory_space<vmem>>, %arg4: memref<64x64xbf16, #tpu.memory_space<vmem>>, %arg5: memref<1x64xf32, #tpu.memory_space<vmem>>, %arg6: memref<64x64xbf16, #tpu.memory_space<vmem>>, %arg7: memref<1x64xf32, #tpu.memory_space<vmem>>, %arg8: memref<64x1024xbf16, #tpu.memory_space<vmem>>, %arg9: memref<1x1024xf32, #tpu.memory_space<vmem>>, %arg10: memref<1x8xf32, #tpu.memory_space<vmem>>, %arg11: memref<8x8xf32, #tpu.memory_space<vmem>>) attributes {dimension_semantics = [#tpu.dimension_semantics<parallel>], iteration_bounds = array<i64: 1>, scalar_prefetch = 0 : i64, scratch_operands = 0 : i64, tpu.core_type = #tpu.core_type<tc>, window_params = [{transform_indices = @transform_0, window_bounds = array<i64: 8, 48>}, {pipeline_mode = #tpu.pipeline_mode<synchronous>, transform_indices = @transform_1, window_bounds = array<i64: 48, 64>}, {pipeline_mode = #tpu.pipeline_mode<synchronous>, transform_indices = @transform_2, window_bounds = array<i64: 1, 64>}, {pipeline_mode = #tpu.pipeline_mode<synchronous>, transform_indices = @transform_3, window_bounds = array<i64: 64, 64>}, {pipeline_mode = #tpu.pipeline_mode<synchronous>, transform_indices = @transform_4, window_bounds = array<i64: 1, 64>}, {pipeline_mode = #tpu.pipeline_mode<synchronous>, transform_indices = @transform_5, window_bounds = array<i64: 64, 64>}, {pipeline_mode = #tpu.pipeline_mode<synchronous>, transform_indices = @transform_6, window_bounds = array<i64: 1, 64>}, {pipeline_mode = #tpu.pipeline_mode<synchronous>, transform_indices = @transform_7, window_bounds = array<i64: 64, 1024>}, {pipeline_mode = #tpu.pipeline_mode<synchronous>, transform_indices = @transform_8, window_bounds = array<i64: 1, 1024>}, {pipeline_mode = #tpu.pipeline_mode<synchronous>, transform_indices = @transform_9, window_bounds = array<i64: 1, 8>}, {transform_indices = @transform_10, window_bounds = array<i64: 8, 8>}]} {
    %c0 = arith.constant 0 : index
    %c0_0 = arith.constant 0 : index
    %0 = vector.load %arg1[%c0, %c0_0] : memref<8x48xbf16, #tpu.memory_space<vmem>>, vector<8x48xbf16>
    %c0_1 = arith.constant 0 : index
    %c0_2 = arith.constant 0 : index
    %1 = vector.load %arg2[%c0_1, %c0_2] : memref<48x64xbf16, #tpu.memory_space<vmem>>, vector<48x64xbf16>
    %cst = arith.constant dense<0.000000e+00> : vector<8x64xf32>
    %2 = tpu.matmul %0, %1, %cst {dimension_numbers = #tpu.dot_dimension_numbers<[1], [0], [0], [1], [0, 0, 1, 1], [], []>} : vector<8x48xbf16>, vector<48x64xbf16>, vector<8x64xf32> -> vector<8x64xf32>
    %c0_3 = arith.constant 0 : index
    %c0_4 = arith.constant 0 : index
    %3 = vector.load %arg3[%c0_3, %c0_4] : memref<1x64xf32, #tpu.memory_space<vmem>>, vector<1x64xf32>
    %4 = vector.broadcast %3 : vector<1x64xf32> to vector<8x64xf32>
    %5 = arith.addf %2, %4 : vector<8x64xf32>
    %cst_5 = arith.constant 0.000000e+00 : f32
    %6 = vector.broadcast %cst_5 : f32 to vector<8x64xf32>
    %7 = arith.maximumf %5, %6 : vector<8x64xf32>
    %8 = arith.truncf %7 : vector<8x64xf32> to vector<8x64xbf16>
    %c0_6 = arith.constant 0 : index
    %c0_7 = arith.constant 0 : index
    %9 = vector.load %arg4[%c0_6, %c0_7] : memref<64x64xbf16, #tpu.memory_space<vmem>>, vector<64x64xbf16>
    %cst_8 = arith.constant dense<0.000000e+00> : vector<8x64xf32>
    %10 = tpu.matmul %8, %9, %cst_8 {dimension_numbers = #tpu.dot_dimension_numbers<[1], [0], [0], [1], [0, 0, 1, 1], [], []>} : vector<8x64xbf16>, vector<64x64xbf16>, vector<8x64xf32> -> vector<8x64xf32>
    %c0_9 = arith.constant 0 : index
    %c0_10 = arith.constant 0 : index
    %11 = vector.load %arg5[%c0_9, %c0_10] : memref<1x64xf32, #tpu.memory_space<vmem>>, vector<1x64xf32>
    %12 = vector.broadcast %11 : vector<1x64xf32> to vector<8x64xf32>
    %13 = arith.addf %10, %12 : vector<8x64xf32>
    %cst_11 = arith.constant 0.000000e+00 : f32
    %14 = vector.broadcast %cst_11 : f32 to vector<8x64xf32>
    %15 = arith.maximumf %13, %14 : vector<8x64xf32>
    %16 = arith.truncf %15 : vector<8x64xf32> to vector<8x64xbf16>
    %c0_12 = arith.constant 0 : index
    %c0_13 = arith.constant 0 : index
    %17 = vector.load %arg6[%c0_12, %c0_13] : memref<64x64xbf16, #tpu.memory_space<vmem>>, vector<64x64xbf16>
    %cst_14 = arith.constant dense<0.000000e+00> : vector<8x64xf32>
    %18 = tpu.matmul %16, %17, %cst_14 {dimension_numbers = #tpu.dot_dimension_numbers<[1], [0], [0], [1], [0, 0, 1, 1], [], []>} : vector<8x64xbf16>, vector<64x64xbf16>, vector<8x64xf32> -> vector<8x64xf32>
    %c0_15 = arith.constant 0 : index
    %c0_16 = arith.constant 0 : index
    %19 = vector.load %arg7[%c0_15, %c0_16] : memref<1x64xf32, #tpu.memory_space<vmem>>, vector<1x64xf32>
    %20 = vector.broadcast %19 : vector<1x64xf32> to vector<8x64xf32>
    %21 = arith.addf %18, %20 : vector<8x64xf32>
    %cst_17 = arith.constant 0.000000e+00 : f32
    %22 = vector.broadcast %cst_17 : f32 to vector<8x64xf32>
    %23 = arith.maximumf %21, %22 : vector<8x64xf32>
    %24 = arith.truncf %23 : vector<8x64xf32> to vector<8x64xbf16>
    %c0_18 = arith.constant 0 : index
    %c0_19 = arith.constant 0 : index
    %25 = vector.load %arg8[%c0_18, %c0_19] : memref<64x1024xbf16, #tpu.memory_space<vmem>>, vector<64x1024xbf16>
    %cst_20 = arith.constant dense<0.000000e+00> : vector<8x1024xf32>
    %26 = tpu.matmul %24, %25, %cst_20 {dimension_numbers = #tpu.dot_dimension_numbers<[1], [0], [0], [1], [0, 0, 1, 1], [], []>} : vector<8x64xbf16>, vector<64x1024xbf16>, vector<8x1024xf32> -> vector<8x1024xf32>
    %c0_21 = arith.constant 0 : index
    %c0_22 = arith.constant 0 : index
    %27 = vector.load %arg9[%c0_21, %c0_22] : memref<1x1024xf32, #tpu.memory_space<vmem>>, vector<1x1024xf32>
    %28 = vector.broadcast %27 : vector<1x1024xf32> to vector<8x1024xf32>
    %29 = arith.addf %26, %28 : vector<8x1024xf32>
    %30 = vector.extract_strided_slice %29 {offsets = [0, 0], sizes = [8, 128], strides = [1, 1]} : vector<8x1024xf32> to vector<8x128xf32>
    %31 = vector.extract_strided_slice %29 {offsets = [0, 512], sizes = [8, 128], strides = [1, 1]} : vector<8x1024xf32> to vector<8x128xf32>
    %32 = arith.mulf %30, %31 : vector<8x128xf32>
    %33 = vector.extract_strided_slice %29 {offsets = [0, 128], sizes = [8, 128], strides = [1, 1]} : vector<8x1024xf32> to vector<8x128xf32>
    %34 = vector.extract_strided_slice %29 {offsets = [0, 640], sizes = [8, 128], strides = [1, 1]} : vector<8x1024xf32> to vector<8x128xf32>
    %35 = arith.mulf %33, %34 : vector<8x128xf32>
    %36 = arith.addf %32, %35 : vector<8x128xf32>
    %37 = vector.extract_strided_slice %29 {offsets = [0, 256], sizes = [8, 128], strides = [1, 1]} : vector<8x1024xf32> to vector<8x128xf32>
    %38 = vector.extract_strided_slice %29 {offsets = [0, 768], sizes = [8, 128], strides = [1, 1]} : vector<8x1024xf32> to vector<8x128xf32>
    %39 = arith.mulf %37, %38 : vector<8x128xf32>
    %40 = arith.addf %36, %39 : vector<8x128xf32>
    %41 = vector.extract_strided_slice %29 {offsets = [0, 384], sizes = [8, 128], strides = [1, 1]} : vector<8x1024xf32> to vector<8x128xf32>
    %42 = vector.extract_strided_slice %29 {offsets = [0, 896], sizes = [8, 128], strides = [1, 1]} : vector<8x1024xf32> to vector<8x128xf32>
    %43 = arith.mulf %41, %42 : vector<8x128xf32>
    %44 = arith.addf %40, %43 : vector<8x128xf32>
    %45 = vector.extract_strided_slice %44 {offsets = [0, 0], sizes = [8, 8], strides = [1, 1]} : vector<8x128xf32> to vector<8x8xf32>
    %c0_23 = arith.constant 0 : index
    %c0_24 = arith.constant 0 : index
    %46 = vector.load %arg10[%c0_23, %c0_24] : memref<1x8xf32, #tpu.memory_space<vmem>>, vector<1x8xf32>
    %47 = vector.broadcast %46 : vector<1x8xf32> to vector<8x8xf32>
    %48 = arith.addf %45, %47 : vector<8x8xf32>
    %c0_25 = arith.constant 0 : index
    %c0_26 = arith.constant 0 : index
    %49 = vector.load %arg11[%c0_25, %c0_26] : memref<8x8xf32, #tpu.memory_space<vmem>>, vector<8x8xf32>
    tpu.vector_store %arg11[%c0_25, %c0_26], %48 {strides = array<i32>} : memref<8x8xf32, #tpu.memory_space<vmem>>, vector<8x8xf32>,
    return
  }
  func.func @transform_0(%arg0: i32) -> (i32, i32) {
    %c0_i32 = arith.constant 0 : i32
    %c0_i32_0 = arith.constant 0 : i32
    return %arg0, %c0_i32 : i32, i32
  }
  func.func @transform_1(%arg0: i32) -> (i32, i32) {
    %c0_i32 = arith.constant 0 : i32
    %c0_i32_0 = arith.constant 0 : i32
    %c0_i32_1 = arith.constant 0 : i32
    return %c0_i32, %c0_i32_0 : i32, i32
  }
  func.func @transform_2(%arg0: i32) -> (i32, i32) {
    %c0_i32 = arith.constant 0 : i32
    %c0_i32_0 = arith.constant 0 : i32
    %c0_i32_1 = arith.constant 0 : i32
    return %c0_i32, %c0_i32_0 : i32, i32
  }
  func.func @transform_3(%arg0: i32) -> (i32, i32) {
    %c0_i32 = arith.constant 0 : i32
    %c0_i32_0 = arith.constant 0 : i32
    %c0_i32_1 = arith.constant 0 : i32
    return %c0_i32, %c0_i32_0 : i32, i32
  }
  func.func @transform_4(%arg0: i32) -> (i32, i32) {
    %c0_i32 = arith.constant 0 : i32
    %c0_i32_0 = arith.constant 0 : i32
    %c0_i32_1 = arith.constant 0 : i32
    return %c0_i32, %c0_i32_0 : i32, i32
  }
  func.func @transform_5(%arg0: i32) -> (i32, i32) {
    %c0_i32 = arith.constant 0 : i32
    %c0_i32_0 = arith.constant 0 : i32
    %c0_i32_1 = arith.constant 0 : i32
    return %c0_i32, %c0_i32_0 : i32, i32
  }
  func.func @transform_6(%arg0: i32) -> (i32, i32) {
    %c0_i32 = arith.constant 0 : i32
    %c0_i32_0 = arith.constant 0 : i32
    %c0_i32_1 = arith.constant 0 : i32
    return %c0_i32, %c0_i32_0 : i32, i32
  }
  func.func @transform_7(%arg0: i32) -> (i32, i32) {
    %c0_i32 = arith.constant 0 : i32
    %c0_i32_0 = arith.constant 0 : i32
    %c0_i32_1 = arith.constant 0 : i32
    return %c0_i32, %c0_i32_0 : i32, i32
  }
  func.func @transform_8(%arg0: i32) -> (i32, i32) {
    %c0_i32 = arith.constant 0 : i32
    %c0_i32_0 = arith.constant 0 : i32
    %c0_i32_1 = arith.constant 0 : i32
    return %c0_i32, %c0_i32_0 : i32, i32
  }
  func.func @transform_9(%arg0: i32) -> (i32, i32) {
    %c0_i32 = arith.constant 0 : i32
    %c0_i32_0 = arith.constant 0 : i32
    %c0_i32_1 = arith.constant 0 : i32
    return %c0_i32, %c0_i32_0 : i32, i32
  }
  func.func @transform_10(%arg0: i32) -> (i32, i32) {
    %c0_i32 = arith.constant 0 : i32
    %c0_i32_0 = arith.constant 0 : i32
    return %arg0, %c0_i32 : i32, i32
  }
}

module attributes {stable_mosaic.version = 11 : i64} {
  func.func @lmf_kernel(%arg0: i32, %arg1: memref<8x48xbf16, #tpu.memory_space<vmem>>, %arg2: memref<48x64xbf16, #tpu.memory_space<vmem>>, %arg3: memref<1x64xf32, #tpu.memory_space<vmem>>, %arg4: memref<64x64xbf16, #tpu.memory_space<vmem>>, %arg5: memref<1x64xf32, #tpu.memory_space<vmem>>, %arg6: memref<64x64xbf16, #tpu.memory_space<vmem>>, %arg7: memref<1x64xf32, #tpu.memory_space<vmem>>, %arg8: memref<64x1024xbf16, #tpu.memory_space<vmem>>, %arg9: memref<1x1024xf32, #tpu.memory_space<vmem>>, %arg10: memref<1x8xf32, #tpu.memory_space<vmem>>, %arg11: memref<8x8xf32, #tpu.memory_space<vmem>>) attributes {dimension_semantics = [#tpu.dimension_semantics<parallel>], iteration_bounds = array<i64: 1>, scalar_prefetch = 0 : i64, scratch_operands = 0 : i64, tpu.core_type = #tpu.core_type<tc>, window_params = [{transform_indices = @transform_0, window_bounds = array<i64: 8, 48>}, {pipeline_mode = #tpu.pipeline_mode<synchronous>, transform_indices = @transform_1, window_bounds = array<i64: 48, 64>}, {pipeline_mode = #tpu.pipeline_mode<synchronous>, transform_indices = @transform_2, window_bounds = array<i64: 1, 64>}, {pipeline_mode = #tpu.pipeline_mode<synchronous>, transform_indices = @transform_3, window_bounds = array<i64: 64, 64>}, {pipeline_mode = #tpu.pipeline_mode<synchronous>, transform_indices = @transform_4, window_bounds = array<i64: 1, 64>}, {pipeline_mode = #tpu.pipeline_mode<synchronous>, transform_indices = @transform_5, window_bounds = array<i64: 64, 64>}, {pipeline_mode = #tpu.pipeline_mode<synchronous>, transform_indices = @transform_6, window_bounds = array<i64: 1, 64>}, {pipeline_mode = #tpu.pipeline_mode<synchronous>, transform_indices = @transform_7, window_bounds = array<i64: 64, 1024>}, {pipeline_mode = #tpu.pipeline_mode<synchronous>, transform_indices = @transform_8, window_bounds = array<i64: 1, 1024>}, {pipeline_mode = #tpu.pipeline_mode<synchronous>, transform_indices = @transform_9, window_bounds = array<i64: 1, 8>}, {transform_indices = @transform_10, window_bounds = array<i64: 8, 8>}]} {
    %c0 = arith.constant 0 : index
    %c0_0 = arith.constant 0 : index
    %0 = vector.load %arg1[%c0, %c0_0] : memref<8x48xbf16, #tpu.memory_space<vmem>>, vector<8x48xbf16>
    %c0_1 = arith.constant 0 : index
    %c0_2 = arith.constant 0 : index
    %1 = vector.load %arg2[%c0_1, %c0_2] : memref<48x64xbf16, #tpu.memory_space<vmem>>, vector<48x64xbf16>
    %cst = arith.constant dense<0.000000e+00> : vector<8x64xf32>
    %2 = tpu.matmul %0, %1, %cst {dimension_numbers = #tpu.dot_dimension_numbers<[1], [0], [0], [1], [0, 0, 1, 1], [], []>} : vector<8x48xbf16>, vector<48x64xbf16>, vector<8x64xf32> -> vector<8x64xf32>
    %c0_3 = arith.constant 0 : index
    %c0_4 = arith.constant 0 : index
    %3 = vector.load %arg3[%c0_3, %c0_4] : memref<1x64xf32, #tpu.memory_space<vmem>>, vector<1x64xf32>
    %4 = vector.broadcast %3 : vector<1x64xf32> to vector<8x64xf32>
    %5 = arith.addf %2, %4 : vector<8x64xf32>
    %cst_5 = arith.constant 0.000000e+00 : f32
    %6 = vector.broadcast %cst_5 : f32 to vector<8x64xf32>
    %7 = arith.maximumf %5, %6 : vector<8x64xf32>
    %8 = arith.truncf %7 : vector<8x64xf32> to vector<8x64xbf16>
    %c0_6 = arith.constant 0 : index
    %c0_7 = arith.constant 0 : index
    %9 = vector.load %arg4[%c0_6, %c0_7] : memref<64x64xbf16, #tpu.memory_space<vmem>>, vector<64x64xbf16>
    %cst_8 = arith.constant dense<0.000000e+00> : vector<8x64xf32>
    %10 = tpu.matmul %8, %9, %cst_8 {dimension_numbers = #tpu.dot_dimension_numbers<[1], [0], [0], [1], [0, 0, 1, 1], [], []>} : vector<8x64xbf16>, vector<64x64xbf16>, vector<8x64xf32> -> vector<8x64xf32>
    %c0_9 = arith.constant 0 : index
    %c0_10 = arith.constant 0 : index
    %11 = vector.load %arg5[%c0_9, %c0_10] : memref<1x64xf32, #tpu.memory_space<vmem>>, vector<1x64xf32>
    %12 = vector.broadcast %11 : vector<1x64xf32> to vector<8x64xf32>
    %13 = arith.addf %10, %12 : vector<8x64xf32>
    %cst_11 = arith.constant 0.000000e+00 : f32
    %14 = vector.broadcast %cst_11 : f32 to vector<8x64xf32>
    %15 = arith.maximumf %13, %14 : vector<8x64xf32>
    %16 = arith.truncf %15 : vector<8x64xf32> to vector<8x64xbf16>
    %c0_12 = arith.constant 0 : index
    %c0_13 = arith.constant 0 : index
    %17 = vector.load %arg6[%c0_12, %c0_13] : memref<64x64xbf16, #tpu.memory_space<vmem>>, vector<64x64xbf16>
    %cst_14 = arith.constant dense<0.000000e+00> : vector<8x64xf32>
    %18 = tpu.matmul %16, %17, %cst_14 {dimension_numbers = #tpu.dot_dimension_numbers<[1], [0], [0], [1], [0, 0, 1, 1], [], []>} : vector<8x64xbf16>, vector<64x64xbf16>, vector<8x64xf32> -> vector<8x64xf32>
    %c0_15 = arith.constant 0 : index
    %c0_16 = arith.constant 0 : index
    %19 = vector.load %arg7[%c0_15, %c0_16] : memref<1x64xf32, #tpu.memory_space<vmem>>, vector<1x64xf32>
    %20 = vector.broadcast %19 : vector<1x64xf32> to vector<8x64xf32>
    %21 = arith.addf %18, %20 : vector<8x64xf32>
    %cst_17 = arith.constant 0.000000e+00 : f32
    %22 = vector.broadcast %cst_17 : f32 to vector<8x64xf32>
    %23 = arith.maximumf %21, %22 : vector<8x64xf32>
    %24 = arith.truncf %23 : vector<8x64xf32> to vector<8x64xbf16>
    %c0_18 = arith.constant 0 : index
    %c0_19 = arith.constant 0 : index
    %25 = vector.load %arg8[%c0_18, %c0_19] : memref<64x1024xbf16, #tpu.memory_space<vmem>>, vector<64x1024xbf16>
    %cst_20 = arith.constant dense<0.000000e+00> : vector<8x1024xf32>
    %26 = tpu.matmul %24, %25, %cst_20 {dimension_numbers = #tpu.dot_dimension_numbers<[1], [0], [0], [1], [0, 0, 1, 1], [], []>} : vector<8x64xbf16>, vector<64x1024xbf16>, vector<8x1024xf32> -> vector<8x1024xf32>
    %c0_21 = arith.constant 0 : index
    %c0_22 = arith.constant 0 : index
    %27 = vector.load %arg9[%c0_21, %c0_22] : memref<1x1024xf32, #tpu.memory_space<vmem>>, vector<1x1024xf32>
    %28 = vector.broadcast %27 : vector<1x1024xf32> to vector<8x1024xf32>
    %29 = arith.addf %26, %28 : vector<8x1024xf32>
    %30 = vector.extract_strided_slice %29 {offsets = [0, 0], sizes = [8, 128], strides = [1, 1]} : vector<8x1024xf32> to vector<8x128xf32>
    %31 = vector.extract_strided_slice %29 {offsets = [0, 512], sizes = [8, 128], strides = [1, 1]} : vector<8x1024xf32> to vector<8x128xf32>
    %32 = arith.mulf %30, %31 : vector<8x128xf32>
    %33 = vector.extract_strided_slice %29 {offsets = [0, 128], sizes = [8, 128], strides = [1, 1]} : vector<8x1024xf32> to vector<8x128xf32>
    %34 = vector.extract_strided_slice %29 {offsets = [0, 640], sizes = [8, 128], strides = [1, 1]} : vector<8x1024xf32> to vector<8x128xf32>
    %35 = arith.mulf %33, %34 : vector<8x128xf32>
    %36 = arith.addf %32, %35 : vector<8x128xf32>
    %37 = vector.extract_strided_slice %29 {offsets = [0, 256], sizes = [8, 128], strides = [1, 1]} : vector<8x1024xf32> to vector<8x128xf32>
    %38 = vector.extract_strided_slice %29 {offsets = [0, 768], sizes = [8, 128], strides = [1, 1]} : vector<8x1024xf32> to vector<8x128xf32>
    %39 = arith.mulf %37, %38 : vector<8x128xf32>
    %40 = arith.addf %36, %39 : vector<8x128xf32>
    %41 = vector.extract_strided_slice %29 {offsets = [0, 384], sizes = [8, 128], strides = [1, 1]} : vector<8x1024xf32> to vector<8x128xf32>
    %42 = vector.extract_strided_slice %29 {offsets = [0, 896], sizes = [8, 128], strides = [1, 1]} : vector<8x1024xf32> to vector<8x128xf32>
    %43 = arith.mulf %41, %42 : vector<8x128xf32>
    %44 = arith.addf %40, %43 : vector<8x128xf32>
    %45 = vector.extract_strided_slice %44 {offsets = [0, 0], sizes = [8, 8], strides = [1, 1]} : vector<8x128xf32> to vector<8x8xf32>
    %c0_23 = arith.constant 0 : index
    %c0_24 = arith.constant 0 : index
    %46 = vector.load %arg10[%c0_23, %c0_24] : memref<1x8xf32, #tpu.memory_space<vmem>>, vector<1x8xf32>
    %47 = vector.broadcast %46 : vector<1x8xf32> to vector<8x8xf32>
    %48 = arith.addf %45, %47 : vector<8x8xf32>
    %c0_25 = arith.constant 0 : index
    %c0_26 = arith.constant 0 : index
    %49 = vector.load %arg11[%c0_25, %c0_26] : memref<8x8xf32, #tpu.memory_space<vmem>>, vector<8x8xf32>
    tpu.vector_store %arg11[%c0_25, %c0_26], %48 {strides = array<i32>} : memref<8x8xf32, #tpu.memory_space<vmem>>, vector<8x8xf32>,
    return
  }
  func.func @transform_0(%arg0: i32) -> (i32, i32) {
    %c0_i32 = arith.constant 0 : i32
    %c0_i32_0 = arith.constant 0 : i32
    return %arg0, %c0_i32 : i32, i32
  }
  func.func @transform_1(%arg0: i32) -> (i32, i32) {
    %c0_i32 = arith.constant 0 : i32
    %c0_i32_0 = arith.constant 0 : i32
    %c0_i32_1 = arith.constant 0 : i32
    return %c0_i32, %c0_i32_0 : i32, i32
  }
  func.func @transform_2(%arg0: i32) -> (i32, i32) {
    %c0_i32 = arith.constant 0 : i32
    %c0_i32_0 = arith.constant 0 : i32
    %c0_i32_1 = arith.constant 0 : i32
    return %c0_i32, %c0_i32_0 : i32, i32
  }
  func.func @transform_3(%arg0: i32) -> (i32, i32) {
    %c0_i32 = arith.constant 0 : i32
    %c0_i32_0 = arith.constant 0 : i32
    %c0_i32_1 = arith.constant 0 : i32
    return %c0_i32, %c0_i32_0 : i32, i32
  }
  func.func @transform_4(%arg0: i32) -> (i32, i32) {
    %c0_i32 = arith.constant 0 : i32
    %c0_i32_0 = arith.constant 0 : i32
    %c0_i32_1 = arith.constant 0 : i32
    return %c0_i32, %c0_i32_0 : i32, i32
  }
  func.func @transform_5(%arg0: i32) -> (i32, i32) {
    %c0_i32 = arith.constant 0 : i32
    %c0_i32_0 = arith.constant 0 : i32
    %c0_i32_1 = arith.constant 0 : i32
    return %c0_i32, %c0_i32_0 : i32, i32
  }
  func.func @transform_6(%arg0: i32) -> (i32, i32) {
    %c0_i32 = arith.constant 0 : i32
    %c0_i32_0 = arith.constant 0 : i32
    %c0_i32_1 = arith.constant 0 : i32
    return %c0_i32, %c0_i32_0 : i32, i32
  }
  func.func @transform_7(%arg0: i32) -> (i32, i32) {
    %c0_i32 = arith.constant 0 : i32
    %c0_i32_0 = arith.constant 0 : i32
    %c0_i32_1 = arith.constant 0 : i32
    return %c0_i32, %c0_i32_0 : i32, i32
  }
  func.func @transform_8(%arg0: i32) -> (i32, i32) {
    %c0_i32 = arith.constant 0 : i32
    %c0_i32_0 = arith.constant 0 : i32
    %c0_i32_1 = arith.constant 0 : i32
    return %c0_i32, %c0_i32_0 : i32, i32
  }
  func.func @transform_9(%arg0: i32) -> (i32, i32) {
    %c0_i32 = arith.constant 0 : i32
    %c0_i32_0 = arith.constant 0 : i32
    %c0_i32_1 = arith.constant 0 : i32
    return %c0_i32, %c0_i32_0 : i32, i32
  }
  func.func @transform_10(%arg0: i32) -> (i32, i32) {
    %c0_i32 = arith.constant 0 : i32
    %c0_i32_0 = arith.constant 0 : i32
    return %arg0, %c0_i32 : i32, i32
  }
}

</mosaic_0001>

<llo_original>
// kernel: tpu_custom_call.1
$region0: #{tpu_custom_call.1}
  #allocation0 [shape = 'u32[]', space=smem, size = 0x4, offset = 0x4, fixed_abs, tag = 'smem constant byte address 0x4 - core index']
  #allocation1 [shape = 'u32[72,128]{1,0:T(1,128)}', space=vmem, size = 0x9000, scoped, tag = 'internal scratch']
  %s0 = inlined_call_operand.hbm [shape: bf16[8,48], index: 0, kind: input, shape index: {}]
  %s1 = inlined_call_operand.hbm [shape: bf16[48,64], index: 1, kind: input, shape index: {}]
  %s2 = inlined_call_operand.vmem [shape: f32[1,64], index: 2, kind: input, shape index: {}]
  %s3 = inlined_call_operand.hbm [shape: bf16[64,64], index: 3, kind: input, shape index: {}]
  %s4 = inlined_call_operand.vmem [shape: f32[1,64], index: 4, kind: input, shape index: {}]
  %s5 = inlined_call_operand.hbm [shape: bf16[64,64], index: 5, kind: input, shape index: {}]
  %s6 = inlined_call_operand.vmem [shape: f32[1,64], index: 6, kind: input, shape index: {}]
  %s7 = inlined_call_operand.hbm [shape: bf16[64,1024], index: 7, kind: input, shape index: {}]
  %s8 = inlined_call_operand.hbm [shape: f32[1,1024], index: 8, kind: input, shape index: {}]
  %s9 = inlined_call_operand.vmem [shape: f32[1,8], index: 9, kind: input, shape index: {}]
  %s10 = inlined_call_operand.hbm [shape: f32[8,8], index: 10, kind: output, shape index: {}]
  %s11 = sld [smem:[#allocation0]]
  $region74: #{tpu_custom_call.1} parent=0
    _
  %s13 = ssub.s32 1, %s11
  %s14 = scalar_select 0, %s13, %s11
  $region1: #{tpu_custom_call.1} parent=0
    #allocation2 [shape = 'u8[2048]{0}', space=vmem, size = 0x800, scoped, tag = 'input window, operand 0, single buffered']
    #allocation3 [shape = 's32[1]{0}', space=sflag, size = 0x4, scoped, tag = 'scoped memory for tpu_custom_call.1']
    #allocation4 [shape = 's32[1]{0}', space=sflag, size = 0x4, scoped, tag = 'scoped memory for tpu_custom_call.1']
    #allocation5 [shape = 'u8[12288]{0}', space=vmem, size = 0x3000, scoped, tag = 'input window, operand 1, single buffered']
    #allocation6 [shape = 's32[1]{0}', space=sflag, size = 0x4, scoped, tag = 'scoped memory for tpu_custom_call.1']
    #allocation7 [shape = 'u8[16384]{0}', space=vmem, size = 0x4000, scoped, tag = 'input window, operand 3, single buffered']
    #allocation8 [shape = 'u8[16384]{0}', space=vmem, size = 0x4000, scoped, tag = 'input window, operand 5, single buffered']
    #allocation9 [shape = 's32[1]{0}', space=sflag, size = 0x4, scoped, tag = 'scoped memory for tpu_custom_call.1']
    #allocation10 [shape = 'u8[131072]{0}', space=vmem, size = 0x20000, scoped, tag = 'input window, operand 7, single buffered']
    #allocation11 [shape = 'u8[4096]{0}', space=vmem, size = 0x1000, scoped, tag = 'input window, operand 8, single buffered']
    #allocation12 [shape = 's32[1]{0}', space=sflag, size = 0x4, scoped, tag = 'scoped memory for tpu_custom_call.1']
    #allocation13 [shape = 'u8[4096]{0}', space=vmem, size = 0x1000, scoped, tag = 'output window, operand 0, single buffered']
    %15 = vsyncpa [#allocation3], 0
    %16 = vsyncpa [#allocation6], 0
    %17 = vsyncpa [#allocation9], 0
    %18 = vsyncpa [#allocation12], 0
    %19 = vsyncpa [#allocation4], 0
    // Predicated region
    $region2: #{tpu_custom_call.1} parent=1 // pred_check
      _
    $region3: #{tpu_custom_call.1} parent=1 // pred_check_branch
      %21 = sbr.rel (0) target = $region5
    $region4: #{tpu_custom_call.1} parent=1 // pred_region
      %23 = vsyncadd [#allocation3], 0
      %s25 = sshll.u32 %s0, 4
      %s26 = int_to_ptr.hbm [resolvable:$true] %s25
      %s27 = sshll.u32 [#allocation2], 4
      %s28 = int_to_ptr.vmem [resolvable:$true] %s27
      %30 = dma.hbm_to_vmem [thread:$0]  %s26, 64, %s28, [#allocation3]
    $region5: #{tpu_custom_call.1} parent=1 // pred_fallthru
      _
    // Predicated region
    $region6: #{tpu_custom_call.1} parent=1 // pred_check
      _
    $region7: #{tpu_custom_call.1} parent=1 // pred_check_branch
      %32 = sbr.rel (0) target = $region9
    $region8: #{tpu_custom_call.1} parent=1 // pred_region
      %34 = vsyncadd [#allocation6], 0
      %s35 = sshll.u32 %s1, 4
      %s36 = int_to_ptr.hbm [resolvable:$true] %s35
      %s37 = sshll.u32 [#allocation5], 4
      %s38 = int_to_ptr.vmem [resolvable:$true] %s37
      %43 = dma.hbm_to_vmem [thread:$0]  %s36, 384, %s38, [#allocation6], 64, 64, 4
    $region9: #{tpu_custom_call.1} parent=1 // pred_fallthru
      _
    // Predicated region
    $region10: #{tpu_custom_call.1} parent=1 // pred_check
      _
    $region11: #{tpu_custom_call.1} parent=1 // pred_check_branch
      %45 = sbr.rel (0) target = $region13
    $region12: #{tpu_custom_call.1} parent=1 // pred_region
      _
    $region13: #{tpu_custom_call.1} parent=1 // pred_fallthru
      _
    // Predicated region
    $region14: #{tpu_custom_call.1} parent=1 // pred_check
      _
    $region15: #{tpu_custom_call.1} parent=1 // pred_check_branch
      %47 = sbr.rel (0) target = $region17
    $region16: #{tpu_custom_call.1} parent=1 // pred_region
      %49 = vsyncadd [#allocation6], 0
      %s50 = sshll.u32 %s3, 4
      %s51 = int_to_ptr.hbm [resolvable:$true] %s50
      %s52 = sshll.u32 [#allocation7], 4
      %s53 = int_to_ptr.vmem [resolvable:$true] %s52
      %58 = dma.hbm_to_vmem [thread:$0]  %s51, 512, %s53, [#allocation6], 64, 64, 4
    $region17: #{tpu_custom_call.1} parent=1 // pred_fallthru
      _
    // Predicated region
    $region18: #{tpu_custom_call.1} parent=1 // pred_check
      _
    $region19: #{tpu_custom_call.1} parent=1 // pred_check_branch
      %60 = sbr.rel (0) target = $region21
    $region20: #{tpu_custom_call.1} parent=1 // pred_region
      _
    $region21: #{tpu_custom_call.1} parent=1 // pred_fallthru
      _
    // Predicated region
    $region22: #{tpu_custom_call.1} parent=1 // pred_check
      _
    $region23: #{tpu_custom_call.1} parent=1 // pred_check_branch
      %62 = sbr.rel (0) target = $region25
    $region24: #{tpu_custom_call.1} parent=1 // pred_region
      %64 = vsyncadd [#allocation9], 0
      %s65 = sshll.u32 %s5, 4
      %s66 = int_to_ptr.hbm [resolvable:$true] %s65
      %s67 = sshll.u32 [#allocation8], 4
      %s68 = int_to_ptr.vmem [resolvable:$true] %s67
      %73 = dma.hbm_to_vmem [thread:$0]  %s66, 512, %s68, [#allocation9], 64, 64, 4
    $region25: #{tpu_custom_call.1} parent=1 // pred_fallthru
      _
    // Predicated region
    $region26: #{tpu_custom_call.1} parent=1 // pred_check
      _
    $region27: #{tpu_custom_call.1} parent=1 // pred_check_branch
      %75 = sbr.rel (0) target = $region29
    $region28: #{tpu_custom_call.1} parent=1 // pred_region
      _
    $region29: #{tpu_custom_call.1} parent=1 // pred_fallthru
      _
    // Predicated region
    $region30: #{tpu_custom_call.1} parent=1 // pred_check
      _
    $region31: #{tpu_custom_call.1} parent=1 // pred_check_branch
      %77 = sbr.rel (0) target = $region33
    $region32: #{tpu_custom_call.1} parent=1 // pred_region
      %79 = vsyncadd [#allocation9], 0
      %s80 = sshll.u32 %s7, 4
      %s81 = int_to_ptr.hbm [resolvable:$true] %s80
      %s82 = sshll.u32 [#allocation10], 4
      %s83 = int_to_ptr.vmem [resolvable:$true] %s82
      %88 = dma.hbm_to_vmem [thread:$0]  %s81, 4096, %s83, [#allocation9], 512, 512, 32
    $region33: #{tpu_custom_call.1} parent=1 // pred_fallthru
      _
    // Predicated region
    $region34: #{tpu_custom_call.1} parent=1 // pred_check
      _
    $region35: #{tpu_custom_call.1} parent=1 // pred_check_branch
      %90 = sbr.rel (0) target = $region37
    $region36: #{tpu_custom_call.1} parent=1 // pred_region
      %92 = vsyncadd [#allocation12], 0
      %s94 = sshll.u32 %s8, 4
      %s95 = int_to_ptr.hbm [resolvable:$true] %s94
      %s96 = sshll.u32 [#allocation11], 4
      %s97 = int_to_ptr.vmem [resolvable:$true] %s96
      %99 = dma.hbm_to_vmem [thread:$0]  %s95, 128, %s97, [#allocation12]
    $region37: #{tpu_custom_call.1} parent=1 // pred_fallthru
      _
    // Predicated region
    $region38: #{tpu_custom_call.1} parent=1 // pred_check
      _
    $region39: #{tpu_custom_call.1} parent=1 // pred_check_branch
      %101 = sbr.rel (0) target = $region41
    $region40: #{tpu_custom_call.1} parent=1 // pred_region
      _
    $region41: #{tpu_custom_call.1} parent=1 // pred_fallthru
      _
    // Predicated region
    $region42: #{tpu_custom_call.1} parent=1 // pred_check
      _
    $region43: #{tpu_custom_call.1} parent=1 // pred_check_branch
      %103 = sbr.rel (0) target = $region45
    $region44: #{tpu_custom_call.1} parent=1 // pred_region
      %105 = dma.done [#allocation3], 64
    $region45: #{tpu_custom_call.1} parent=1 // pred_fallthru
      _
    // Predicated region
    $region46: #{tpu_custom_call.1} parent=1 // pred_check
      _
    $region47: #{tpu_custom_call.1} parent=1 // pred_check_branch
      %107 = sbr.rel (0) target = $region49
    $region48: #{tpu_custom_call.1} parent=1 // pred_region
      %109 = dma.done [#allocation6], 384
    $region49: #{tpu_custom_call.1} parent=1 // pred_fallthru
      _
    // Predicated region
    $region50: #{tpu_custom_call.1} parent=1 // pred_check
      _
    $region51: #{tpu_custom_call.1} parent=1 // pred_check_branch
      %111 = sbr.rel (0) target = $region53
    $region52: #{tpu_custom_call.1} parent=1 // pred_region
      %113 = dma.done [#allocation6], 512
    $region53: #{tpu_custom_call.1} parent=1 // pred_fallthru
      _
    // Predicated region
    $region54: #{tpu_custom_call.1} parent=1 // pred_check
      _
    $region55: #{tpu_custom_call.1} parent=1 // pred_check_branch
      %115 = sbr.rel (0) target = $region57
    $region56: #{tpu_custom_call.1} parent=1 // pred_region
      %117 = dma.done [#allocation9], 512
    $region57: #{tpu_custom_call.1} parent=1 // pred_fallthru
      _
    // Predicated region
    $region58: #{tpu_custom_call.1} parent=1 // pred_check
      _
    $region59: #{tpu_custom_call.1} parent=1 // pred_check_branch
      %119 = sbr.rel (0) target = $region61
    $region60: #{tpu_custom_call.1} parent=1 // pred_region
      %121 = dma.done [#allocation9], 4096
    $region61: #{tpu_custom_call.1} parent=1 // pred_fallthru
      _
    // Predicated region
    $region62: #{tpu_custom_call.1} parent=1 // pred_check
      _
    $region63: #{tpu_custom_call.1} parent=1 // pred_check_branch
      %123 = sbr.rel (0) target = $region65
    $region64: #{tpu_custom_call.1} parent=1 // pred_region
      %125 = dma.done [#allocation12], 128
    $region65: #{tpu_custom_call.1} parent=1 // pred_fallthru
      _
    %v127 = vld [vmem:[#allocation2] sm:$0xf]
    %v128 = vld [vmem:[#allocation5] sm:$0xf]
    %v129 = vld [vmem:[#allocation5 + $0x4] sm:$0xf]
    %v130 = vld [vmem:[#allocation5 + $0x8] sm:$0xf]
    %v131 = vld [vmem:[#allocation5 + $0xc] sm:$0xf]
    %v132 = vld [vmem:[#allocation5 + $0x10] sm:$0xf]
    %v133 = vld [vmem:[#allocation5 + $0x14] sm:$0xf]
    %v134 = vld [vmem:[%s2] sm:$0x1]
    %v136 = vperm.slane %v134, 0
    %v144 = vunpack.c.l.b16 %v128
    %v145 = vunpack.c.l.b16 %v129
    %v146 = vunpack.c.l.b16 %v130
    %v147 = vunpack.c.l.b16 %v131
    %v148 = vunpack.c.l.b16 %v132
    %v149 = vunpack.c.l.b16 %v133
    %v150 = vpack.c.b16 %v145, %v144
    %v151 = vpack.c.b16 %v147, %v146
    %v152 = vpack.c.b16 %v149, %v148
    %vm156 = vcmask 392192
    %v158 = vsel %vm156, %v127, 0
    %160 = vmatpush.bf16.msra.mxu0 0
    %161 = vmatpush.bf16.msra.mxu0 0
    %162 = vmatpush.bf16.msra.mxu0 0
    %163 = vmatpush.bf16.msra.mxu0 0
    %164 = vmatpush.bf16.msra.mxu0 0
    %165 = vmatpush.bf16.msra.mxu0 %v152
    %166 = vmatpush.bf16.msra.mxu0 %v151
    %167 = vmatpush.bf16.msra.mxu0 %v150
    %168 = vmatmul.bf16.gmra.mxu0 %v158
    %v169 = vpop.f32.mrf.mxu0
    %v170 = vadd.f32 %v136, %v169
    %v171 = vpop.f32.mrf.mxu0
    %172 = vdwg.mxu0
    %v173 = vmax.f32 %v170, 0.0
    %v174 = vpack.c.bf16 %v173, %v173
    %v175 = vld [vmem:[#allocation7] sm:$0xf]
    %v176 = vld [vmem:[#allocation7 + $0x4] sm:$0xf]
    %v177 = vld [vmem:[#allocation7 + $0x8] sm:$0xf]
    %v178 = vld [vmem:[#allocation7 + $0xc] sm:$0xf]
    %v179 = vld [vmem:[#allocation7 + $0x10] sm:$0xf]
    %v180 = vld [vmem:[#allocation7 + $0x14] sm:$0xf]
    %v181 = vld [vmem:[#allocation7 + $0x18] sm:$0xf]
    %v182 = vld [vmem:[#allocation7 + $0x1c] sm:$0xf]
    %v183 = vld [vmem:[%s4] sm:$0x1]
    %v185 = vperm.slane %v183, 0
    %v195 = vunpack.c.l.b16 %v175
    %v196 = vunpack.c.l.b16 %v176
    %v197 = vunpack.c.l.b16 %v177
    %v198 = vunpack.c.l.b16 %v178
    %v199 = vunpack.c.l.b16 %v179
    %v200 = vunpack.c.l.b16 %v180
    %v201 = vunpack.c.l.b16 %v181
    %v202 = vunpack.c.l.b16 %v182
    %v203 = vpack.c.b16 %v196, %v195
    %v204 = vpack.c.b16 %v198, %v197
    %v205 = vpack.c.b16 %v200, %v199
    %v206 = vpack.c.b16 %v202, %v201
    %vm211 = vcmask 523264
    %v213 = vsel %vm211, %v174, 0
    %215 = vmatpush.bf16.msra.mxu0 0
    %216 = vmatpush.bf16.msra.mxu0 0
    %217 = vmatpush.bf16.msra.mxu0 0
    %218 = vmatpush.bf16.msra.mxu0 0
    %219 = vmatpush.bf16.msra.mxu0 %v206
    %220 = vmatpush.bf16.msra.mxu0 %v205
    %221 = vmatpush.bf16.msra.mxu0 %v204
    %222 = vmatpush.bf16.msra.mxu0 %v203
    %223 = vmatmul.bf16.gmra.mxu0 %v213
    %v224 = vpop.f32.mrf.mxu0
    %v225 = vadd.f32 %v185, %v224
    %v226 = vpop.f32.mrf.mxu0
    %227 = vdwg.mxu0
    %v228 = vmax.f32 %v225, 0.0
    %v229 = vpack.c.bf16 %v228, %v228
    %v230 = vld [vmem:[#allocation8] sm:$0xf]
    %v231 = vld [vmem:[#allocation8 + $0x4] sm:$0xf]
    %v232 = vld [vmem:[#allocation8 + $0x8] sm:$0xf]
    %v233 = vld [vmem:[#allocation8 + $0xc] sm:$0xf]
    %v234 = vld [vmem:[#allocation8 + $0x10] sm:$0xf]
    %v235 = vld [vmem:[#allocation8 + $0x14] sm:$0xf]
    %v236 = vld [vmem:[#allocation8 + $0x18] sm:$0xf]
    %v237 = vld [vmem:[#allocation8 + $0x1c] sm:$0xf]
    %v238 = vld [vmem:[%s6] sm:$0x1]
    %v240 = vperm.slane %v238, 0
    %v250 = vunpack.c.l.b16 %v230
    %v251 = vunpack.c.l.b16 %v231
    %v252 = vunpack.c.l.b16 %v232
    %v253 = vunpack.c.l.b16 %v233
    %v254 = vunpack.c.l.b16 %v234
    %v255 = vunpack.c.l.b16 %v235
    %v256 = vunpack.c.l.b16 %v236
    %v257 = vunpack.c.l.b16 %v237
    %v258 = vpack.c.b16 %v251, %v250
    %v259 = vpack.c.b16 %v253, %v252
    %v260 = vpack.c.b16 %v255, %v254
    %v261 = vpack.c.b16 %v257, %v256
    %v267 = vsel %vm211, %v229, 0
    %269 = vmatpush.bf16.msra.mxu0 0
    %270 = vmatpush.bf16.msra.mxu0 0
    %271 = vmatpush.bf16.msra.mxu0 0
    %272 = vmatpush.bf16.msra.mxu0 0
    %273 = vmatpush.bf16.msra.mxu0 %v261
    %274 = vmatpush.bf16.msra.mxu0 %v260
    %275 = vmatpush.bf16.msra.mxu0 %v259
    %276 = vmatpush.bf16.msra.mxu0 %v258
    %277 = vmatmul.bf16.gmra.mxu0 %v267
    %v278 = vpop.f32.mrf.mxu0
    %v279 = vadd.f32 %v240, %v278
    %v280 = vpop.f32.mrf.mxu0
    %281 = vdwg.mxu0
    %v282 = vmax.f32 %v279, 0.0
    %v283 = vpack.c.bf16 %v282, %v282
    %v284 = vld [vmem:[#allocation10] sm:$0xff]
    %v285 = vld [vmem:[#allocation10 + $0x8] sm:$0xff]
    %v286 = vld [vmem:[#allocation10 + $0x10] sm:$0xff]
    %v287 = vld [vmem:[#allocation10 + $0x18] sm:$0xff]
    %v288 = vld [vmem:[#allocation10 + $0x20] sm:$0xff]
    %v289 = vld [vmem:[#allocation10 + $0x28] sm:$0xff]
    %v290 = vld [vmem:[#allocation10 + $0x30] sm:$0xff]
    %v291 = vld [vmem:[#allocation10 + $0x38] sm:$0xff]
    %v292 = vld [vmem:[#allocation10 + $0x40] sm:$0xff]
    %v293 = vld [vmem:[#allocation10 + $0x48] sm:$0xff]
    %v294 = vld [vmem:[#allocation10 + $0x50] sm:$0xff]
    %v295 = vld [vmem:[#allocation10 + $0x58] sm:$0xff]
    %v296 = vld [vmem:[#allocation10 + $0x60] sm:$0xff]
    %v297 = vld [vmem:[#allocation10 + $0x68] sm:$0xff]
    %v298 = vld [vmem:[#allocation10 + $0x70] sm:$0xff]
    %v299 = vld [vmem:[#allocation10 + $0x78] sm:$0xff]
    %v300 = vld [vmem:[#allocation10 + $0x80] sm:$0xff]
    %v301 = vld [vmem:[#allocation10 + $0x88] sm:$0xff]
    %v302 = vld [vmem:[#allocation10 + $0x90] sm:$0xff]
    %v303 = vld [vmem:[#allocation10 + $0x98] sm:$0xff]
    %v304 = vld [vmem:[#allocation10 + $0xa0] sm:$0xff]
    %v305 = vld [vmem:[#allocation10 + $0xa8] sm:$0xff]
    %v306 = vld [vmem:[#allocation10 + $0xb0] sm:$0xff]
    %v307 = vld [vmem:[#allocation10 + $0xb8] sm:$0xff]
    %v308 = vld [vmem:[#allocation10 + $0xc0] sm:$0xff]
    %v309 = vld [vmem:[#allocation10 + $0xc8] sm:$0xff]
    %v310 = vld [vmem:[#allocation10 + $0xd0] sm:$0xff]
    %v311 = vld [vmem:[#allocation10 + $0xd8] sm:$0xff]
    %v312 = vld [vmem:[#allocation10 + $0xe0] sm:$0xff]
    %v313 = vld [vmem:[#allocation10 + $0xe8] sm:$0xff]
    %v314 = vld [vmem:[#allocation10 + $0xf0] sm:$0xff]
    %v315 = vld [vmem:[#allocation10 + $0xf8] sm:$0xff]
    %v316 = vld [vmem:[#allocation11] sm:$0xff]
    %v318 = vperm.slane %v316, 0
    %v319 = vperm.slane %v316, 1
    %v320 = vperm.slane %v316, 2
    %v321 = vperm.slane %v316, 3
    %v322 = vperm.slane %v316, 4
    %v323 = vperm.slane %v316, 5
    %v324 = vperm.slane %v316, 6
    %v325 = vperm.slane %v316, 7
    %v366 = vunpack.c.l.b16 %v284
    %v367 = vunpack.c.h.b16 %v284
    %v368 = vunpack.c.l.b16 %v285
    %v369 = vunpack.c.h.b16 %v285
    %v370 = vunpack.c.l.b16 %v286
    %v371 = vunpack.c.h.b16 %v286
    %v372 = vunpack.c.l.b16 %v287
    %v373 = vunpack.c.h.b16 %v287
    %v374 = vunpack.c.l.b16 %v288
    %v375 = vunpack.c.h.b16 %v288
    %v376 = vunpack.c.l.b16 %v289
    %v377 = vunpack.c.h.b16 %v289
    %v378 = vunpack.c.l.b16 %v290
    %v379 = vunpack.c.h.b16 %v290
    %v380 = vunpack.c.l.b16 %v291
    %v381 = vunpack.c.h.b16 %v291
    %v382 = vunpack.c.l.b16 %v292
    %v383 = vunpack.c.h.b16 %v292
    %v384 = vunpack.c.l.b16 %v293
    %v385 = vunpack.c.h.b16 %v293
    %v386 = vunpack.c.l.b16 %v294
    %v387 = vunpack.c.h.b16 %v294
    %v388 = vunpack.c.l.b16 %v295
    %v389 = vunpack.c.h.b16 %v295
    %v390 = vunpack.c.l.b16 %v296
    %v391 = vunpack.c.h.b16 %v296
    %v392 = vunpack.c.l.b16 %v297
    %v393 = vunpack.c.h.b16 %v297
    %v394 = vunpack.c.l.b16 %v298
    %v395 = vunpack.c.h.b16 %v298
    %v396 = vunpack.c.l.b16 %v299
    %v397 = vunpack.c.h.b16 %v299
    %v398 = vunpack.c.l.b16 %v300
    %v399 = vunpack.c.h.b16 %v300
    %v400 = vunpack.c.l.b16 %v301
    %v401 = vunpack.c.h.b16 %v301
    %v402 = vunpack.c.l.b16 %v302
    %v403 = vunpack.c.h.b16 %v302
    %v404 = vunpack.c.l.b16 %v303
    %v405 = vunpack.c.h.b16 %v303
    %v406 = vunpack.c.l.b16 %v304
    %v407 = vunpack.c.h.b16 %v304
    %v408 = vunpack.c.l.b16 %v305
    %v409 = vunpack.c.h.b16 %v305
    %v410 = vunpack.c.l.b16 %v306
    %v411 = vunpack.c.h.b16 %v306
    %v412 = vunpack.c.l.b16 %v307
    %v413 = vunpack.c.h.b16 %v307
    %v414 = vunpack.c.l.b16 %v308
    %v415 = vunpack.c.h.b16 %v308
    %v416 = vunpack.c.l.b16 %v309
    %v417 = vunpack.c.h.b16 %v309
    %v418 = vunpack.c.l.b16 %v310
    %v419 = vunpack.c.h.b16 %v310
    %v420 = vunpack.c.l.b16 %v311
    %v421 = vunpack.c.h.b16 %v311
    %v422 = vunpack.c.l.b16 %v312
    %v423 = vunpack.c.h.b16 %v312
    %v424 = vunpack.c.l.b16 %v313
    %v425 = vunpack.c.h.b16 %v313
    %v426 = vunpack.c.l.b16 %v314
    %v427 = vunpack.c.h.b16 %v314
    %v428 = vunpack.c.l.b16 %v315
    %v429 = vunpack.c.h.b16 %v315
    %v430 = vpack.c.b16 %v374, %v366
    %v431 = vpack.c.b16 %v375, %v367
    %v432 = vpack.c.b16 %v376, %v368
    %v433 = vpack.c.b16 %v377, %v369
    %v434 = vpack.c.b16 %v378, %v370
    %v435 = vpack.c.b16 %v379, %v371
    %v436 = vpack.c.b16 %v380, %v372
    %v437 = vpack.c.b16 %v381, %v373
    %v438 = vpack.c.b16 %v390, %v382
    %v439 = vpack.c.b16 %v391, %v383
    %v440 = vpack.c.b16 %v392, %v384
    %v441 = vpack.c.b16 %v393, %v385
    %v442 = vpack.c.b16 %v394, %v386
    %v443 = vpack.c.b16 %v395, %v387
    %v444 = vpack.c.b16 %v396, %v388
    %v445 = vpack.c.b16 %v397, %v389
    %v446 = vpack.c.b16 %v406, %v398
    %v447 = vpack.c.b16 %v407, %v399
    %v448 = vpack.c.b16 %v408, %v400
    %v449 = vpack.c.b16 %v409, %v401
    %v450 = vpack.c.b16 %v410, %v402
    %v451 = vpack.c.b16 %v411, %v403
    %v452 = vpack.c.b16 %v412, %v404
    %v453 = vpack.c.b16 %v413, %v405
    %v454 = vpack.c.b16 %v422, %v414
    %v455 = vpack.c.b16 %v423, %v415
    %v456 = vpack.c.b16 %v424, %v416
    %v457 = vpack.c.b16 %v425, %v417
    %v458 = vpack.c.b16 %v426, %v418
    %v459 = vpack.c.b16 %v427, %v419
    %v460 = vpack.c.b16 %v428, %v420
    %v461 = vpack.c.b16 %v429, %v421
    %v495 = vsel %vm211, %v283, 0
    %497 = vmatpush.bf16.msra.mxu0 0
    %498 = vmatpush.bf16.msra.mxu0 0
    %499 = vmatpush.bf16.msra.mxu0 0
    %500 = vmatpush.bf16.msra.mxu0 0
    %501 = vmatpush.bf16.msra.mxu0 %v454
    %502 = vmatpush.bf16.msra.mxu0 %v446
    %503 = vmatpush.bf16.msra.mxu0 %v438
    %504 = vmatpush.bf16.msra.mxu0 %v430
    %505 = vmatmul.bf16.gmra.mxu0 %v495
    %v506 = vpop.f32.mrf.mxu0
    %v507 = vadd.f32 %v318, %v506
    %v508 = vpop.f32.mrf.mxu0
    %509 = vdwg.mxu0
    %510 = vmatpush.bf16.msra.mxu0 0
    %511 = vmatpush.bf16.msra.mxu0 0
    %512 = vmatpush.bf16.msra.mxu0 0
    %513 = vmatpush.bf16.msra.mxu0 0
    %514 = vmatpush.bf16.msra.mxu0 %v455
    %515 = vmatpush.bf16.msra.mxu0 %v447
    %516 = vmatpush.bf16.msra.mxu0 %v439
    %517 = vmatpush.bf16.msra.mxu0 %v431
    %518 = vmatmul.bf16.gmra.mxu0 %v495
    %v519 = vpop.f32.mrf.mxu0
    %v520 = vadd.f32 %v319, %v519
    %v521 = vpop.f32.mrf.mxu0
    %522 = vdwg.mxu0
    %523 = vmatpush.bf16.msra.mxu0 0
    %524 = vmatpush.bf16.msra.mxu0 0
    %525 = vmatpush.bf16.msra.mxu0 0
    %526 = vmatpush.bf16.msra.mxu0 0
    %527 = vmatpush.bf16.msra.mxu0 %v456
    %528 = vmatpush.bf16.msra.mxu0 %v448
    %529 = vmatpush.bf16.msra.mxu0 %v440
    %530 = vmatpush.bf16.msra.mxu0 %v432
    %531 = vmatmul.bf16.gmra.mxu0 %v495
    %v532 = vpop.f32.mrf.mxu0
    %v533 = vadd.f32 %v320, %v532
    %v534 = vpop.f32.mrf.mxu0
    %535 = vdwg.mxu0
    %536 = vmatpush.bf16.msra.mxu0 0
    %537 = vmatpush.bf16.msra.mxu0 0
    %538 = vmatpush.bf16.msra.mxu0 0
    %539 = vmatpush.bf16.msra.mxu0 0
    %540 = vmatpush.bf16.msra.mxu0 %v457
    %541 = vmatpush.bf16.msra.mxu0 %v449
    %542 = vmatpush.bf16.msra.mxu0 %v441
    %543 = vmatpush.bf16.msra.mxu0 %v433
    %544 = vmatmul.bf16.gmra.mxu0 %v495
    %v545 = vpop.f32.mrf.mxu0
    %v546 = vadd.f32 %v321, %v545
    %v547 = vpop.f32.mrf.mxu0
    %548 = vdwg.mxu0
    %549 = vmatpush.bf16.msra.mxu0 0
    %550 = vmatpush.bf16.msra.mxu0 0
    %551 = vmatpush.bf16.msra.mxu0 0
    %552 = vmatpush.bf16.msra.mxu0 0
    %553 = vmatpush.bf16.msra.mxu0 %v458
    %554 = vmatpush.bf16.msra.mxu0 %v450
    %555 = vmatpush.bf16.msra.mxu0 %v442
    %556 = vmatpush.bf16.msra.mxu0 %v434
    %557 = vmatmul.bf16.gmra.mxu0 %v495
    %v558 = vpop.f32.mrf.mxu0
    %v559 = vadd.f32 %v322, %v558
    %v560 = vpop.f32.mrf.mxu0
    %561 = vdwg.mxu0
    %562 = vmatpush.bf16.msra.mxu0 0
    %563 = vmatpush.bf16.msra.mxu0 0
    %564 = vmatpush.bf16.msra.mxu0 0
    %565 = vmatpush.bf16.msra.mxu0 0
    %566 = vmatpush.bf16.msra.mxu0 %v459
    %567 = vmatpush.bf16.msra.mxu0 %v451
    %568 = vmatpush.bf16.msra.mxu0 %v443
    %569 = vmatpush.bf16.msra.mxu0 %v435
    %570 = vmatmul.bf16.gmra.mxu0 %v495
    %v571 = vpop.f32.mrf.mxu0
    %v572 = vadd.f32 %v323, %v571
    %v573 = vpop.f32.mrf.mxu0
    %574 = vdwg.mxu0
    %575 = vmatpush.bf16.msra.mxu0 0
    %576 = vmatpush.bf16.msra.mxu0 0
    %577 = vmatpush.bf16.msra.mxu0 0
    %578 = vmatpush.bf16.msra.mxu0 0
    %579 = vmatpush.bf16.msra.mxu0 %v460
    %580 = vmatpush.bf16.msra.mxu0 %v452
    %581 = vmatpush.bf16.msra.mxu0 %v444
    %582 = vmatpush.bf16.msra.mxu0 %v436
    %583 = vmatmul.bf16.gmra.mxu0 %v495
    %v584 = vpop.f32.mrf.mxu0
    %v585 = vadd.f32 %v324, %v584
    %v586 = vpop.f32.mrf.mxu0
    %587 = vdwg.mxu0
    %588 = vmatpush.bf16.msra.mxu0 0
    %589 = vmatpush.bf16.msra.mxu0 0
    %590 = vmatpush.bf16.msra.mxu0 0
    %591 = vmatpush.bf16.msra.mxu0 0
    %592 = vmatpush.bf16.msra.mxu0 %v461
    %593 = vmatpush.bf16.msra.mxu0 %v453
    %594 = vmatpush.bf16.msra.mxu0 %v445
    %595 = vmatpush.bf16.msra.mxu0 %v437
    %596 = vmatmul.bf16.gmra.mxu0 %v495
    %v597 = vpop.f32.mrf.mxu0
    %v598 = vadd.f32 %v325, %v597
    %v599 = vpop.f32.mrf.mxu0
    %600 = vdwg.mxu0
    %v601 = vmul.f32 %v507, %v559
    %v602 = vmul.f32 %v520, %v572
    %v603 = vadd.f32 %v601, %v602
    %v604 = vmul.f32 %v533, %v585
    %v605 = vadd.f32 %v603, %v604
    %v606 = vmul.f32 %v546, %v598
    %v607 = vadd.f32 %v605, %v606
    %v608 = vld [vmem:[%s9] sm:$0x1]
    %v610 = vperm.slane %v608, 0
    %v612 = vadd.f32 %v607, %v610
    %vm613 = vcmask 64512
    %614 = vst.msk [vmem:[#allocation13] sm:$0xff] %vm613, %v612
    // Predicated region
    $region66: #{tpu_custom_call.1} parent=1 // pred_check
      _
    $region67: #{tpu_custom_call.1} parent=1 // pred_check_branch
      %616 = sbr.rel (0) target = $region69
    $region68: #{tpu_custom_call.1} parent=1 // pred_region
      %618 = vsyncadd [#allocation4], 0
      %s620 = sshll.u32 [#allocation13], 4
      %s621 = int_to_ptr.vmem [resolvable:$true] %s620
      %s622 = sshll.u32 %s10, 4
      %s623 = int_to_ptr.hbm [resolvable:$true] %s622
      %625 = dma.vmem_to_hbm [thread:$0]  %s621, 128, %s623, [#allocation4]
    $region69: #{tpu_custom_call.1} parent=1 // pred_fallthru
      _
    // Predicated region
    $region70: #{tpu_custom_call.1} parent=1 // pred_check
      _
    $region71: #{tpu_custom_call.1} parent=1 // pred_check_branch
      %627 = sbr.rel (0) target = $region73
    $region72: #{tpu_custom_call.1} parent=1 // pred_region
      %629 = dma.done [#allocation4], 128
    $region73: #{tpu_custom_call.1} parent=1 // pred_fallthru
      _
    %630 = vsyncpa [#allocation3], 1
    %631 = vsyncpa [#allocation6], 1
    %632 = vsyncpa [#allocation9], 1
    %633 = vsyncpa [#allocation12], 1
    %634 = vsyncpa [#allocation4], 1

// kernel: tpu_custom_call.1
$region0: #{tpu_custom_call.1}
  #allocation0 [shape = 'u32[]', space=smem, size = 0x4, offset = 0x4, fixed_abs, tag = 'smem constant byte address 0x4 - core index']
  #allocation1 [shape = 'u32[72,128]{1,0:T(1,128)}', space=vmem, size = 0x9000, scoped, tag = 'internal scratch']
  %s0 = inlined_call_operand.hbm [shape: bf16[8,48], index: 0, kind: input, shape index: {}]
  %s1 = inlined_call_operand.hbm [shape: bf16[48,64], index: 1, kind: input, shape index: {}]
  %s2 = inlined_call_operand.vmem [shape: f32[1,64], index: 2, kind: input, shape index: {}]
  %s3 = inlined_call_operand.hbm [shape: bf16[64,64], index: 3, kind: input, shape index: {}]
  %s4 = inlined_call_operand.vmem [shape: f32[1,64], index: 4, kind: input, shape index: {}]
  %s5 = inlined_call_operand.hbm [shape: bf16[64,64], index: 5, kind: input, shape index: {}]
  %s6 = inlined_call_operand.vmem [shape: f32[1,64], index: 6, kind: input, shape index: {}]
  %s7 = inlined_call_operand.hbm [shape: bf16[64,1024], index: 7, kind: input, shape index: {}]
  %s8 = inlined_call_operand.hbm [shape: f32[1,1024], index: 8, kind: input, shape index: {}]
  %s9 = inlined_call_operand.vmem [shape: f32[1,8], index: 9, kind: input, shape index: {}]
  %s10 = inlined_call_operand.hbm [shape: f32[8,8], index: 10, kind: output, shape index: {}]
  %s11 = sld [smem:[#allocation0]]
  $region74: #{tpu_custom_call.1} parent=0
    _
  %s13 = ssub.s32 1, %s11
  %s14 = scalar_select 0, %s13, %s11
  $region1: #{tpu_custom_call.1} parent=0
    #allocation2 [shape = 'u8[2048]{0}', space=vmem, size = 0x800, scoped, tag = 'input window, operand 0, single buffered']
    #allocation3 [shape = 's32[1]{0}', space=sflag, size = 0x4, scoped, tag = 'scoped memory for tpu_custom_call.1']
    #allocation4 [shape = 's32[1]{0}', space=sflag, size = 0x4, scoped, tag = 'scoped memory for tpu_custom_call.1']
    #allocation5 [shape = 'u8[12288]{0}', space=vmem, size = 0x3000, scoped, tag = 'input window, operand 1, single buffered']
    #allocation6 [shape = 's32[1]{0}', space=sflag, size = 0x4, scoped, tag = 'scoped memory for tpu_custom_call.1']
    #allocation7 [shape = 'u8[16384]{0}', space=vmem, size = 0x4000, scoped, tag = 'input window, operand 3, single buffered']
    #allocation8 [shape = 'u8[16384]{0}', space=vmem, size = 0x4000, scoped, tag = 'input window, operand 5, single buffered']
    #allocation9 [shape = 's32[1]{0}', space=sflag, size = 0x4, scoped, tag = 'scoped memory for tpu_custom_call.1']
    #allocation10 [shape = 'u8[131072]{0}', space=vmem, size = 0x20000, scoped, tag = 'input window, operand 7, single buffered']
    #allocation11 [shape = 'u8[4096]{0}', space=vmem, size = 0x1000, scoped, tag = 'input window, operand 8, single buffered']
    #allocation12 [shape = 's32[1]{0}', space=sflag, size = 0x4, scoped, tag = 'scoped memory for tpu_custom_call.1']
    #allocation13 [shape = 'u8[4096]{0}', space=vmem, size = 0x1000, scoped, tag = 'output window, operand 0, single buffered']
    %15 = vsyncpa [#allocation3], 0
    %16 = vsyncpa [#allocation6], 0
    %17 = vsyncpa [#allocation9], 0
    %18 = vsyncpa [#allocation12], 0
    %19 = vsyncpa [#allocation4], 0
    // Predicated region
    $region2: #{tpu_custom_call.1} parent=1 // pred_check
      _
    $region3: #{tpu_custom_call.1} parent=1 // pred_check_branch
      %21 = sbr.rel (0) target = $region5
    $region4: #{tpu_custom_call.1} parent=1 // pred_region
      %23 = vsyncadd [#allocation3], 0
      %s25 = sshll.u32 %s0, 4
      %s26 = int_to_ptr.hbm [resolvable:$true] %s25
      %s27 = sshll.u32 [#allocation2], 4
      %s28 = int_to_ptr.vmem [resolvable:$true] %s27
      %30 = dma.hbm_to_vmem [thread:$0]  %s26, 64, %s28, [#allocation3]
    $region5: #{tpu_custom_call.1} parent=1 // pred_fallthru
      _
    // Predicated region
    $region6: #{tpu_custom_call.1} parent=1 // pred_check
      _
    $region7: #{tpu_custom_call.1} parent=1 // pred_check_branch
      %32 = sbr.rel (0) target = $region9
    $region8: #{tpu_custom_call.1} parent=1 // pred_region
      %34 = vsyncadd [#allocation6], 0
      %s35 = sshll.u32 %s1, 4
      %s36 = int_to_ptr.hbm [resolvable:$true] %s35
      %s37 = sshll.u32 [#allocation5], 4
      %s38 = int_to_ptr.vmem [resolvable:$true] %s37
      %43 = dma.hbm_to_vmem [thread:$0]  %s36, 384, %s38, [#allocation6], 64, 64, 4
    $region9: #{tpu_custom_call.1} parent=1 // pred_fallthru
      _
    // Predicated region
    $region10: #{tpu_custom_call.1} parent=1 // pred_check
      _
    $region11: #{tpu_custom_call.1} parent=1 // pred_check_branch
      %45 = sbr.rel (0) target = $region13
    $region12: #{tpu_custom_call.1} parent=1 // pred_region
      _
    $region13: #{tpu_custom_call.1} parent=1 // pred_fallthru
      _
    // Predicated region
    $region14: #{tpu_custom_call.1} parent=1 // pred_check
      _
    $region15: #{tpu_custom_call.1} parent=1 // pred_check_branch
      %47 = sbr.rel (0) target = $region17
    $region16: #{tpu_custom_call.1} parent=1 // pred_region
      %49 = vsyncadd [#allocation6], 0
      %s50 = sshll.u32 %s3, 4
      %s51 = int_to_ptr.hbm [resolvable:$true] %s50
      %s52 = sshll.u32 [#allocation7], 4
      %s53 = int_to_ptr.vmem [resolvable:$true] %s52
      %58 = dma.hbm_to_vmem [thread:$0]  %s51, 512, %s53, [#allocation6], 64, 64, 4
    $region17: #{tpu_custom_call.1} parent=1 // pred_fallthru
      _
    // Predicated region
    $region18: #{tpu_custom_call.1} parent=1 // pred_check
      _
    $region19: #{tpu_custom_call.1} parent=1 // pred_check_branch
      %60 = sbr.rel (0) target = $region21
    $region20: #{tpu_custom_call.1} parent=1 // pred_region
      _
    $region21: #{tpu_custom_call.1} parent=1 // pred_fallthru
      _
    // Predicated region
    $region22: #{tpu_custom_call.1} parent=1 // pred_check
      _
    $region23: #{tpu_custom_call.1} parent=1 // pred_check_branch
      %62 = sbr.rel (0) target = $region25
    $region24: #{tpu_custom_call.1} parent=1 // pred_region
      %64 = vsyncadd [#allocation9], 0
      %s65 = sshll.u32 %s5, 4
      %s66 = int_to_ptr.hbm [resolvable:$true] %s65
      %s67 = sshll.u32 [#allocation8], 4
      %s68 = int_to_ptr.vmem [resolvable:$true] %s67
      %73 = dma.hbm_to_vmem [thread:$0]  %s66, 512, %s68, [#allocation9], 64, 64, 4
    $region25: #{tpu_custom_call.1} parent=1 // pred_fallthru
      _
    // Predicated region
    $region26: #{tpu_custom_call.1} parent=1 // pred_check
      _
    $region27: #{tpu_custom_call.1} parent=1 // pred_check_branch
      %75 = sbr.rel (0) target = $region29
    $region28: #{tpu_custom_call.1} parent=1 // pred_region
      _
    $region29: #{tpu_custom_call.1} parent=1 // pred_fallthru
      _
    // Predicated region
    $region30: #{tpu_custom_call.1} parent=1 // pred_check
      _
    $region31: #{tpu_custom_call.1} parent=1 // pred_check_branch
      %77 = sbr.rel (0) target = $region33
    $region32: #{tpu_custom_call.1} parent=1 // pred_region
      %79 = vsyncadd [#allocation9], 0
      %s80 = sshll.u32 %s7, 4
      %s81 = int_to_ptr.hbm [resolvable:$true] %s80
      %s82 = sshll.u32 [#allocation10], 4
      %s83 = int_to_ptr.vmem [resolvable:$true] %s82
      %88 = dma.hbm_to_vmem [thread:$0]  %s81, 4096, %s83, [#allocation9], 512, 512, 32
    $region33: #{tpu_custom_call.1} parent=1 // pred_fallthru
      _
    // Predicated region
    $region34: #{tpu_custom_call.1} parent=1 // pred_check
      _
    $region35: #{tpu_custom_call.1} parent=1 // pred_check_branch
      %90 = sbr.rel (0) target = $region37
    $region36: #{tpu_custom_call.1} parent=1 // pred_region
      %92 = vsyncadd [#allocation12], 0
      %s94 = sshll.u32 %s8, 4
      %s95 = int_to_ptr.hbm [resolvable:$true] %s94
      %s96 = sshll.u32 [#allocation11], 4
      %s97 = int_to_ptr.vmem [resolvable:$true] %s96
      %99 = dma.hbm_to_vmem [thread:$0]  %s95, 128, %s97, [#allocation12]
    $region37: #{tpu_custom_call.1} parent=1 // pred_fallthru
      _
    // Predicated region
    $region38: #{tpu_custom_call.1} parent=1 // pred_check
      _
    $region39: #{tpu_custom_call.1} parent=1 // pred_check_branch
      %101 = sbr.rel (0) target = $region41
    $region40: #{tpu_custom_call.1} parent=1 // pred_region
      _
    $region41: #{tpu_custom_call.1} parent=1 // pred_fallthru
      _
    // Predicated region
    $region42: #{tpu_custom_call.1} parent=1 // pred_check
      _
    $region43: #{tpu_custom_call.1} parent=1 // pred_check_branch
      %103 = sbr.rel (0) target = $region45
    $region44: #{tpu_custom_call.1} parent=1 // pred_region
      %105 = dma.done [#allocation3], 64
    $region45: #{tpu_custom_call.1} parent=1 // pred_fallthru
      _
    // Predicated region
    $region46: #{tpu_custom_call.1} parent=1 // pred_check
      _
    $region47: #{tpu_custom_call.1} parent=1 // pred_check_branch
      %107 = sbr.rel (0) target = $region49
    $region48: #{tpu_custom_call.1} parent=1 // pred_region
      %109 = dma.done [#allocation6], 384
    $region49: #{tpu_custom_call.1} parent=1 // pred_fallthru
      _
    // Predicated region
    $region50: #{tpu_custom_call.1} parent=1 // pred_check
      _
    $region51: #{tpu_custom_call.1} parent=1 // pred_check_branch
      %111 = sbr.rel (0) target = $region53
    $region52: #{tpu_custom_call.1} parent=1 // pred_region
      %113 = dma.done [#allocation6], 512
    $region53: #{tpu_custom_call.1} parent=1 // pred_fallthru
      _
    // Predicated region
    $region54: #{tpu_custom_call.1} parent=1 // pred_check
      _
    $region55: #{tpu_custom_call.1} parent=1 // pred_check_branch
      %115 = sbr.rel (0) target = $region57
    $region56: #{tpu_custom_call.1} parent=1 // pred_region
      %117 = dma.done [#allocation9], 512
    $region57: #{tpu_custom_call.1} parent=1 // pred_fallthru
      _
    // Predicated region
    $region58: #{tpu_custom_call.1} parent=1 // pred_check
      _
    $region59: #{tpu_custom_call.1} parent=1 // pred_check_branch
      %119 = sbr.rel (0) target = $region61
    $region60: #{tpu_custom_call.1} parent=1 // pred_region
      %121 = dma.done [#allocation9], 4096
    $region61: #{tpu_custom_call.1} parent=1 // pred_fallthru
      _
    // Predicated region
    $region62: #{tpu_custom_call.1} parent=1 // pred_check
      _
    $region63: #{tpu_custom_call.1} parent=1 // pred_check_branch
      %123 = sbr.rel (0) target = $region65
    $region64: #{tpu_custom_call.1} parent=1 // pred_region
      %125 = dma.done [#allocation12], 128
    $region65: #{tpu_custom_call.1} parent=1 // pred_fallthru
      _
    %v127 = vld [vmem:[#allocation2] sm:$0xf]
    %v128 = vld [vmem:[#allocation5] sm:$0xf]
    %v129 = vld [vmem:[#allocation5 + $0x4] sm:$0xf]
    %v130 = vld [vmem:[#allocation5 + $0x8] sm:$0xf]
    %v131 = vld [vmem:[#allocation5 + $0xc] sm:$0xf]
    %v132 = vld [vmem:[#allocation5 + $0x10] sm:$0xf]
    %v133 = vld [vmem:[#allocation5 + $0x14] sm:$0xf]
    %v134 = vld [vmem:[%s2] sm:$0x1]
    %v136 = vperm.slane %v134, 0
    %v144 = vunpack.c.l.b16 %v128
    %v145 = vunpack.c.l.b16 %v129
    %v146 = vunpack.c.l.b16 %v130
    %v147 = vunpack.c.l.b16 %v131
    %v148 = vunpack.c.l.b16 %v132
    %v149 = vunpack.c.l.b16 %v133
    %v150 = vpack.c.b16 %v145, %v144
    %v151 = vpack.c.b16 %v147, %v146
    %v152 = vpack.c.b16 %v149, %v148
    %vm156 = vcmask 392192
    %v158 = vsel %vm156, %v127, 0
    %160 = vmatpush.bf16.msra.mxu0 0
    %161 = vmatpush.bf16.msra.mxu0 0
    %162 = vmatpush.bf16.msra.mxu0 0
    %163 = vmatpush.bf16.msra.mxu0 0
    %164 = vmatpush.bf16.msra.mxu0 0
    %165 = vmatpush.bf16.msra.mxu0 %v152
    %166 = vmatpush.bf16.msra.mxu0 %v151
    %167 = vmatpush.bf16.msra.mxu0 %v150
    %168 = vmatmul.bf16.gmra.mxu0 %v158
    %v169 = vpop.f32.mrf.mxu0
    %v170 = vadd.f32 %v136, %v169
    %v171 = vpop.f32.mrf.mxu0
    %172 = vdwg.mxu0
    %v173 = vmax.f32 %v170, 0.0
    %v174 = vpack.c.bf16 %v173, %v173
    %v175 = vld [vmem:[#allocation7] sm:$0xf]
    %v176 = vld [vmem:[#allocation7 + $0x4] sm:$0xf]
    %v177 = vld [vmem:[#allocation7 + $0x8] sm:$0xf]
    %v178 = vld [vmem:[#allocation7 + $0xc] sm:$0xf]
    %v179 = vld [vmem:[#allocation7 + $0x10] sm:$0xf]
    %v180 = vld [vmem:[#allocation7 + $0x14] sm:$0xf]
    %v181 = vld [vmem:[#allocation7 + $0x18] sm:$0xf]
    %v182 = vld [vmem:[#allocation7 + $0x1c] sm:$0xf]
    %v183 = vld [vmem:[%s4] sm:$0x1]
    %v185 = vperm.slane %v183, 0
    %v195 = vunpack.c.l.b16 %v175
    %v196 = vunpack.c.l.b16 %v176
    %v197 = vunpack.c.l.b16 %v177
    %v198 = vunpack.c.l.b16 %v178
    %v199 = vunpack.c.l.b16 %v179
    %v200 = vunpack.c.l.b16 %v180
    %v201 = vunpack.c.l.b16 %v181
    %v202 = vunpack.c.l.b16 %v182
    %v203 = vpack.c.b16 %v196, %v195
    %v204 = vpack.c.b16 %v198, %v197
    %v205 = vpack.c.b16 %v200, %v199
    %v206 = vpack.c.b16 %v202, %v201
    %vm211 = vcmask 523264
    %v213 = vsel %vm211, %v174, 0
    %215 = vmatpush.bf16.msra.mxu0 0
    %216 = vmatpush.bf16.msra.mxu0 0
    %217 = vmatpush.bf16.msra.mxu0 0
    %218 = vmatpush.bf16.msra.mxu0 0
    %219 = vmatpush.bf16.msra.mxu0 %v206
    %220 = vmatpush.bf16.msra.mxu0 %v205
    %221 = vmatpush.bf16.msra.mxu0 %v204
    %222 = vmatpush.bf16.msra.mxu0 %v203
    %223 = vmatmul.bf16.gmra.mxu0 %v213
    %v224 = vpop.f32.mrf.mxu0
    %v225 = vadd.f32 %v185, %v224
    %v226 = vpop.f32.mrf.mxu0
    %227 = vdwg.mxu0
    %v228 = vmax.f32 %v225, 0.0
    %v229 = vpack.c.bf16 %v228, %v228
    %v230 = vld [vmem:[#allocation8] sm:$0xf]
    %v231 = vld [vmem:[#allocation8 + $0x4] sm:$0xf]
    %v232 = vld [vmem:[#allocation8 + $0x8] sm:$0xf]
    %v233 = vld [vmem:[#allocation8 + $0xc] sm:$0xf]
    %v234 = vld [vmem:[#allocation8 + $0x10] sm:$0xf]
    %v235 = vld [vmem:[#allocation8 + $0x14] sm:$0xf]
    %v236 = vld [vmem:[#allocation8 + $0x18] sm:$0xf]
    %v237 = vld [vmem:[#allocation8 + $0x1c] sm:$0xf]
    %v238 = vld [vmem:[%s6] sm:$0x1]
    %v240 = vperm.slane %v238, 0
    %v250 = vunpack.c.l.b16 %v230
    %v251 = vunpack.c.l.b16 %v231
    %v252 = vunpack.c.l.b16 %v232
    %v253 = vunpack.c.l.b16 %v233
    %v254 = vunpack.c.l.b16 %v234
    %v255 = vunpack.c.l.b16 %v235
    %v256 = vunpack.c.l.b16 %v236
    %v257 = vunpack.c.l.b16 %v237
    %v258 = vpack.c.b16 %v251, %v250
    %v259 = vpack.c.b16 %v253, %v252
    %v260 = vpack.c.b16 %v255, %v254
    %v261 = vpack.c.b16 %v257, %v256
    %v267 = vsel %vm211, %v229, 0
    %269 = vmatpush.bf16.msra.mxu0 0
    %270 = vmatpush.bf16.msra.mxu0 0
    %271 = vmatpush.bf16.msra.mxu0 0
    %272 = vmatpush.bf16.msra.mxu0 0
    %273 = vmatpush.bf16.msra.mxu0 %v261
    %274 = vmatpush.bf16.msra.mxu0 %v260
    %275 = vmatpush.bf16.msra.mxu0 %v259
    %276 = vmatpush.bf16.msra.mxu0 %v258
    %277 = vmatmul.bf16.gmra.mxu0 %v267
    %v278 = vpop.f32.mrf.mxu0
    %v279 = vadd.f32 %v240, %v278
    %v280 = vpop.f32.mrf.mxu0
    %281 = vdwg.mxu0
    %v282 = vmax.f32 %v279, 0.0
    %v283 = vpack.c.bf16 %v282, %v282
    %v284 = vld [vmem:[#allocation10] sm:$0xff]
    %v285 = vld [vmem:[#allocation10 + $0x8] sm:$0xff]
    %v286 = vld [vmem:[#allocation10 + $0x10] sm:$0xff]
    %v287 = vld [vmem:[#allocation10 + $0x18] sm:$0xff]
    %v288 = vld [vmem:[#allocation10 + $0x20] sm:$0xff]
    %v289 = vld [vmem:[#allocation10 + $0x28] sm:$0xff]
    %v290 = vld [vmem:[#allocation10 + $0x30] sm:$0xff]
    %v291 = vld [vmem:[#allocation10 + $0x38] sm:$0xff]
    %v292 = vld [vmem:[#allocation10 + $0x40] sm:$0xff]
    %v293 = vld [vmem:[#allocation10 + $0x48] sm:$0xff]
    %v294 = vld [vmem:[#allocation10 + $0x50] sm:$0xff]
    %v295 = vld [vmem:[#allocation10 + $0x58] sm:$0xff]
    %v296 = vld [vmem:[#allocation10 + $0x60] sm:$0xff]
    %v297 = vld [vmem:[#allocation10 + $0x68] sm:$0xff]
    %v298 = vld [vmem:[#allocation10 + $0x70] sm:$0xff]
    %v299 = vld [vmem:[#allocation10 + $0x78] sm:$0xff]
    %v300 = vld [vmem:[#allocation10 + $0x80] sm:$0xff]
    %v301 = vld [vmem:[#allocation10 + $0x88] sm:$0xff]
    %v302 = vld [vmem:[#allocation10 + $0x90] sm:$0xff]
    %v303 = vld [vmem:[#allocation10 + $0x98] sm:$0xff]
    %v304 = vld [vmem:[#allocation10 + $0xa0] sm:$0xff]
    %v305 = vld [vmem:[#allocation10 + $0xa8] sm:$0xff]
    %v306 = vld [vmem:[#allocation10 + $0xb0] sm:$0xff]
    %v307 = vld [vmem:[#allocation10 + $0xb8] sm:$0xff]
    %v308 = vld [vmem:[#allocation10 + $0xc0] sm:$0xff]
    %v309 = vld [vmem:[#allocation10 + $0xc8] sm:$0xff]
    %v310 = vld [vmem:[#allocation10 + $0xd0] sm:$0xff]
    %v311 = vld [vmem:[#allocation10 + $0xd8] sm:$0xff]
    %v312 = vld [vmem:[#allocation10 + $0xe0] sm:$0xff]
    %v313 = vld [vmem:[#allocation10 + $0xe8] sm:$0xff]
    %v314 = vld [vmem:[#allocation10 + $0xf0] sm:$0xff]
    %v315 = vld [vmem:[#allocation10 + $0xf8] sm:$0xff]
    %v316 = vld [vmem:[#allocation11] sm:$0xff]
    %v318 = vperm.slane %v316, 0
    %v319 = vperm.slane %v316, 1
    %v320 = vperm.slane %v316, 2
    %v321 = vperm.slane %v316, 3
    %v322 = vperm.slane %v316, 4
    %v323 = vperm.slane %v316, 5
    %v324 = vperm.slane %v316, 6
    %v325 = vperm.slane %v316, 7
    %v366 = vunpack.c.l.b16 %v284
    %v367 = vunpack.c.h.b16 %v284
    %v368 = vunpack.c.l.b16 %v285
    %v369 = vunpack.c.h.b16 %v285
    %v370 = vunpack.c.l.b16 %v286
    %v371 = vunpack.c.h.b16 %v286
    %v372 = vunpack.c.l.b16 %v287
    %v373 = vunpack.c.h.b16 %v287
    %v374 = vunpack.c.l.b16 %v288
    %v375 = vunpack.c.h.b16 %v288
    %v376 = vunpack.c.l.b16 %v289
    %v377 = vunpack.c.h.b16 %v289
    %v378 = vunpack.c.l.b16 %v290
    %v379 = vunpack.c.h.b16 %v290
    %v380 = vunpack.c.l.b16 %v291
    %v381 = vunpack.c.h.b16 %v291
    %v382 = vunpack.c.l.b16 %v292
    %v383 = vunpack.c.h.b16 %v292
    %v384 = vunpack.c.l.b16 %v293
    %v385 = vunpack.c.h.b16 %v293
    %v386 = vunpack.c.l.b16 %v294
    %v387 = vunpack.c.h.b16 %v294
    %v388 = vunpack.c.l.b16 %v295
    %v389 = vunpack.c.h.b16 %v295
    %v390 = vunpack.c.l.b16 %v296
    %v391 = vunpack.c.h.b16 %v296
    %v392 = vunpack.c.l.b16 %v297
    %v393 = vunpack.c.h.b16 %v297
    %v394 = vunpack.c.l.b16 %v298
    %v395 = vunpack.c.h.b16 %v298
    %v396 = vunpack.c.l.b16 %v299
    %v397 = vunpack.c.h.b16 %v299
    %v398 = vunpack.c.l.b16 %v300
    %v399 = vunpack.c.h.b16 %v300
    %v400 = vunpack.c.l.b16 %v301
    %v401 = vunpack.c.h.b16 %v301
    %v402 = vunpack.c.l.b16 %v302
    %v403 = vunpack.c.h.b16 %v302
    %v404 = vunpack.c.l.b16 %v303
    %v405 = vunpack.c.h.b16 %v303
    %v406 = vunpack.c.l.b16 %v304
    %v407 = vunpack.c.h.b16 %v304
    %v408 = vunpack.c.l.b16 %v305
    %v409 = vunpack.c.h.b16 %v305
    %v410 = vunpack.c.l.b16 %v306
    %v411 = vunpack.c.h.b16 %v306
    %v412 = vunpack.c.l.b16 %v307
    %v413 = vunpack.c.h.b16 %v307
    %v414 = vunpack.c.l.b16 %v308
    %v415 = vunpack.c.h.b16 %v308
    %v416 = vunpack.c.l.b16 %v309
    %v417 = vunpack.c.h.b16 %v309
    %v418 = vunpack.c.l.b16 %v310
    %v419 = vunpack.c.h.b16 %v310
    %v420 = vunpack.c.l.b16 %v311
    %v421 = vunpack.c.h.b16 %v311
    %v422 = vunpack.c.l.b16 %v312
    %v423 = vunpack.c.h.b16 %v312
    %v424 = vunpack.c.l.b16 %v313
    %v425 = vunpack.c.h.b16 %v313
    %v426 = vunpack.c.l.b16 %v314
    %v427 = vunpack.c.h.b16 %v314
    %v428 = vunpack.c.l.b16 %v315
    %v429 = vunpack.c.h.b16 %v315
    %v430 = vpack.c.b16 %v374, %v366
    %v431 = vpack.c.b16 %v375, %v367
    %v432 = vpack.c.b16 %v376, %v368
    %v433 = vpack.c.b16 %v377, %v369
    %v434 = vpack.c.b16 %v378, %v370
    %v435 = vpack.c.b16 %v379, %v371
    %v436 = vpack.c.b16 %v380, %v372
    %v437 = vpack.c.b16 %v381, %v373
    %v438 = vpack.c.b16 %v390, %v382
    %v439 = vpack.c.b16 %v391, %v383
    %v440 = vpack.c.b16 %v392, %v384
    %v441 = vpack.c.b16 %v393, %v385
    %v442 = vpack.c.b16 %v394, %v386
    %v443 = vpack.c.b16 %v395, %v387
    %v444 = vpack.c.b16 %v396, %v388
    %v445 = vpack.c.b16 %v397, %v389
    %v446 = vpack.c.b16 %v406, %v398
    %v447 = vpack.c.b16 %v407, %v399
    %v448 = vpack.c.b16 %v408, %v400
    %v449 = vpack.c.b16 %v409, %v401
    %v450 = vpack.c.b16 %v410, %v402
    %v451 = vpack.c.b16 %v411, %v403
    %v452 = vpack.c.b16 %v412, %v404
    %v453 = vpack.c.b16 %v413, %v405
    %v454 = vpack.c.b16 %v422, %v414
    %v455 = vpack.c.b16 %v423, %v415
    %v456 = vpack.c.b16 %v424, %v416
    %v457 = vpack.c.b16 %v425, %v417
    %v458 = vpack.c.b16 %v426, %v418
    %v459 = vpack.c.b16 %v427, %v419
    %v460 = vpack.c.b16 %v428, %v420
    %v461 = vpack.c.b16 %v429, %v421
    %v495 = vsel %vm211, %v283, 0
    %497 = vmatpush.bf16.msra.mxu0 0
    %498 = vmatpush.bf16.msra.mxu0 0
    %499 = vmatpush.bf16.msra.mxu0 0
    %500 = vmatpush.bf16.msra.mxu0 0
    %501 = vmatpush.bf16.msra.mxu0 %v454
    %502 = vmatpush.bf16.msra.mxu0 %v446
    %503 = vmatpush.bf16.msra.mxu0 %v438
    %504 = vmatpush.bf16.msra.mxu0 %v430
    %505 = vmatmul.bf16.gmra.mxu0 %v495
    %v506 = vpop.f32.mrf.mxu0
    %v507 = vadd.f32 %v318, %v506
    %v508 = vpop.f32.mrf.mxu0
    %509 = vdwg.mxu0
    %510 = vmatpush.bf16.msra.mxu0 0
    %511 = vmatpush.bf16.msra.mxu0 0
    %512 = vmatpush.bf16.msra.mxu0 0
    %513 = vmatpush.bf16.msra.mxu0 0
    %514 = vmatpush.bf16.msra.mxu0 %v455
    %515 = vmatpush.bf16.msra.mxu0 %v447
    %516 = vmatpush.bf16.msra.mxu0 %v439
    %517 = vmatpush.bf16.msra.mxu0 %v431
    %518 = vmatmul.bf16.gmra.mxu0 %v495
    %v519 = vpop.f32.mrf.mxu0
    %v520 = vadd.f32 %v319, %v519
    %v521 = vpop.f32.mrf.mxu0
    %522 = vdwg.mxu0
    %523 = vmatpush.bf16.msra.mxu0 0
    %524 = vmatpush.bf16.msra.mxu0 0
    %525 = vmatpush.bf16.msra.mxu0 0
    %526 = vmatpush.bf16.msra.mxu0 0
    %527 = vmatpush.bf16.msra.mxu0 %v456
    %528 = vmatpush.bf16.msra.mxu0 %v448
    %529 = vmatpush.bf16.msra.mxu0 %v440
    %530 = vmatpush.bf16.msra.mxu0 %v432
    %531 = vmatmul.bf16.gmra.mxu0 %v495
    %v532 = vpop.f32.mrf.mxu0
    %v533 = vadd.f32 %v320, %v532
    %v534 = vpop.f32.mrf.mxu0
    %535 = vdwg.mxu0
    %536 = vmatpush.bf16.msra.mxu0 0
    %537 = vmatpush.bf16.msra.mxu0 0
    %538 = vmatpush.bf16.msra.mxu0 0
    %539 = vmatpush.bf16.msra.mxu0 0
    %540 = vmatpush.bf16.msra.mxu0 %v457
    %541 = vmatpush.bf16.msra.mxu0 %v449
    %542 = vmatpush.bf16.msra.mxu0 %v441
    %543 = vmatpush.bf16.msra.mxu0 %v433
    %544 = vmatmul.bf16.gmra.mxu0 %v495
    %v545 = vpop.f32.mrf.mxu0
    %v546 = vadd.f32 %v321, %v545
    %v547 = vpop.f32.mrf.mxu0
    %548 = vdwg.mxu0
    %549 = vmatpush.bf16.msra.mxu0 0
    %550 = vmatpush.bf16.msra.mxu0 0
    %551 = vmatpush.bf16.msra.mxu0 0
    %552 = vmatpush.bf16.msra.mxu0 0
    %553 = vmatpush.bf16.msra.mxu0 %v458
    %554 = vmatpush.bf16.msra.mxu0 %v450
    %555 = vmatpush.bf16.msra.mxu0 %v442
    %556 = vmatpush.bf16.msra.mxu0 %v434
    %557 = vmatmul.bf16.gmra.mxu0 %v495
    %v558 = vpop.f32.mrf.mxu0
    %v559 = vadd.f32 %v322, %v558
    %v560 = vpop.f32.mrf.mxu0
    %561 = vdwg.mxu0
    %562 = vmatpush.bf16.msra.mxu0 0
    %563 = vmatpush.bf16.msra.mxu0 0
    %564 = vmatpush.bf16.msra.mxu0 0
    %565 = vmatpush.bf16.msra.mxu0 0
    %566 = vmatpush.bf16.msra.mxu0 %v459
    %567 = vmatpush.bf16.msra.mxu0 %v451
    %568 = vmatpush.bf16.msra.mxu0 %v443
    %569 = vmatpush.bf16.msra.mxu0 %v435
    %570 = vmatmul.bf16.gmra.mxu0 %v495
    %v571 = vpop.f32.mrf.mxu0
    %v572 = vadd.f32 %v323, %v571
    %v573 = vpop.f32.mrf.mxu0
    %574 = vdwg.mxu0
    %575 = vmatpush.bf16.msra.mxu0 0
    %576 = vmatpush.bf16.msra.mxu0 0
    %577 = vmatpush.bf16.msra.mxu0 0
    %578 = vmatpush.bf16.msra.mxu0 0
    %579 = vmatpush.bf16.msra.mxu0 %v460
    %580 = vmatpush.bf16.msra.mxu0 %v452
    %581 = vmatpush.bf16.msra.mxu0 %v444
    %582 = vmatpush.bf16.msra.mxu0 %v436
    %583 = vmatmul.bf16.gmra.mxu0 %v495
    %v584 = vpop.f32.mrf.mxu0
    %v585 = vadd.f32 %v324, %v584
    %v586 = vpop.f32.mrf.mxu0
    %587 = vdwg.mxu0
    %588 = vmatpush.bf16.msra.mxu0 0
    %589 = vmatpush.bf16.msra.mxu0 0
    %590 = vmatpush.bf16.msra.mxu0 0
    %591 = vmatpush.bf16.msra.mxu0 0
    %592 = vmatpush.bf16.msra.mxu0 %v461
    %593 = vmatpush.bf16.msra.mxu0 %v453
    %594 = vmatpush.bf16.msra.mxu0 %v445
    %595 = vmatpush.bf16.msra.mxu0 %v437
    %596 = vmatmul.bf16.gmra.mxu0 %v495
    %v597 = vpop.f32.mrf.mxu0
    %v598 = vadd.f32 %v325, %v597
    %v599 = vpop.f32.mrf.mxu0
    %600 = vdwg.mxu0
    %v601 = vmul.f32 %v507, %v559
    %v602 = vmul.f32 %v520, %v572
    %v603 = vadd.f32 %v601, %v602
    %v604 = vmul.f32 %v533, %v585
    %v605 = vadd.f32 %v603, %v604
    %v606 = vmul.f32 %v546, %v598
    %v607 = vadd.f32 %v605, %v606
    %v608 = vld [vmem:[%s9] sm:$0x1]
    %v610 = vperm.slane %v608, 0
    %v612 = vadd.f32 %v607, %v610
    %vm613 = vcmask 64512
    %614 = vst.msk [vmem:[#allocation13] sm:$0xff] %vm613, %v612
    // Predicated region
    $region66: #{tpu_custom_call.1} parent=1 // pred_check
      _
    $region67: #{tpu_custom_call.1} parent=1 // pred_check_branch
      %616 = sbr.rel (0) target = $region69
    $region68: #{tpu_custom_call.1} parent=1 // pred_region
      %618 = vsyncadd [#allocation4], 0
      %s620 = sshll.u32 [#allocation13], 4
      %s621 = int_to_ptr.vmem [resolvable:$true] %s620
      %s622 = sshll.u32 %s10, 4
      %s623 = int_to_ptr.hbm [resolvable:$true] %s622
      %625 = dma.vmem_to_hbm [thread:$0]  %s621, 128, %s623, [#allocation4]
    $region69: #{tpu_custom_call.1} parent=1 // pred_fallthru
      _
    // Predicated region
    $region70: #{tpu_custom_call.1} parent=1 // pred_check
      _
    $region71: #{tpu_custom_call.1} parent=1 // pred_check_branch
      %627 = sbr.rel (0) target = $region73
    $region72: #{tpu_custom_call.1} parent=1 // pred_region
      %629 = dma.done [#allocation4], 128
    $region73: #{tpu_custom_call.1} parent=1 // pred_fallthru
      _
    %630 = vsyncpa [#allocation3], 1
    %631 = vsyncpa [#allocation6], 1
    %632 = vsyncpa [#allocation9], 1
    %633 = vsyncpa [#allocation12], 1
    %634 = vsyncpa [#allocation4], 1

</llo_original>
